<compile_context>
chip_gen: v5e
topology: v5e:2x2
jax: 0.10.0
libtpu: 0.0.40
codegen_flags: <defaults>
</compile_context>

<pallas_src>
import jax
import jax.numpy as jnp
from jax.experimental import pallas as pl
from jax.experimental.pallas import tpu as pltpu


# ---------------------------------------------------------------------------
# Kernels
# ---------------------------------------------------------------------------
def _linear_sigmoid(h, w_ref, b_ref):
    """sigmoid(h @ W + b): bf16 MXU matmul, f32 accumulation, EUP epilogue."""
    z = jnp.dot(h.astype(jnp.bfloat16), w_ref[...],
                preferred_element_type=jnp.float32)
    z = z + b_ref[...]                     # (1, F) bias row broadcast over rows
    # exp + vrcp both go to the EUP slot -> frees VALU for bias add / casts.
    return pl.reciprocal(1.0 + jnp.exp(-z), approx=True)


def stacked_ae4_kernel(x_ref, w1, b1, w2, b2, w3, b3, w4, b4, o_ref):
    """flagx=False path: encoder1 -> encoder2 -> encoder3 -> encoder4."""
    h = x_ref[...]
    h = _linear_sigmoid(h, w1, b1)
    h = _linear_sigmoid(h, w2, b2)
    h = _linear_sigmoid(h, w3, b3)
    h = _linear_sigmoid(h, w4, b4)
    o_ref[...] = h.astype(o_ref.dtype)


def stacked_ae2_kernel(x_ref, w1, b1, w2, b2, o_ref):
    """flagx=True path: encoder1 -> encoder2 only."""
    h = x_ref[...]
    h = _linear_sigmoid(h, w1, b1)
    h = _linear_sigmoid(h, w2, b2)
    o_ref[...] = h.astype(o_ref.dtype)


# ---------------------------------------------------------------------------
# Wrapper
# ---------------------------------------------------------------------------
def stacked_autoencoder_forward(x, params, *, flagx=False, tb=256,
                                out_dtype=None):
    """Pallas-backed forward pass of StackedAutoEncoder.

    x      : [B, ...] input, flattened to [B, D0] (== x.view(B, -1) in torch)
    params : list of 4 (w, b) pairs where
               w : [in_features, out_features]  (pre-transposed, bfloat16)
               b : [1, out_features]            (float32)
    flagx  : False -> all 4 encoder layers; True -> first 2 only.
    tb     : max batch tile (rows per grid step). Default 256: fills the
             256-row MXU (v6e/v7x) / 2x128 passes (v5e) and keeps >=2 grid
             steps for any B > 256 (v7x megacore).
    out_dtype : output dtype (default: input dtype). Pass jnp.bfloat16 to
             halve HBM writeback if the consumer allows it (v5e win).
    """
    B = x.shape[0]
    xf = x.reshape(B, -1)
    D0 = xf.shape[1]

    n_layers = 2 if flagx else 4
    used = params[:n_layers]
    dims = [D0] + [w.shape[1] for (w, _) in used]
    d_out = dims[-1]
    out_dtype = xf.dtype if out_dtype is None else out_dtype

    # ---- batch tile selection --------------------------------------------
    # Big tile amortizes per-step overhead and fills MXU rows; keep it a
    # multiple of 16 (bf16 packs 16 rows per vreg). pl.cdiv pads the tail.
    TB = max(1, min(tb, B))
    if TB >= 16:
        TB -= TB % 16
    grid = (pl.cdiv(B, TB),)

    # Batch-tiled input; weights/biases stay VMEM-resident via constant
    # index_maps and are single-buffered (their block never changes, so a
    # second pipeline buffer would be pure VMEM waste).
    operands = [xf]
    in_specs = [pl.BlockSpec((TB, D0), lambda i: (i, 0))]
    for (w, b) in used:
        d_in, d_o = w.shape
        operands += [w, b]
        in_specs += [
            pl.BlockSpec((d_in, d_o), lambda i: (0, 0),
                         pipeline_mode=pl.Buffered(1)),
            pl.BlockSpec((1, d_o), lambda i: (0, 0),
                         pipeline_mode=pl.Buffered(1)),
        ]

    out_specs = pl.BlockSpec((TB, d_out), lambda i: (i, 0))
    out_shape = jax.ShapeDtypeStruct((B, d_out), out_dtype)

    kernel = stacked_ae2_kernel if flagx else stacked_ae4_kernel

    flops = 2 * B * sum(dims[i] * dims[i + 1] for i in range(n_layers))
    # sigmoid = exp + reciprocal -> ~2 transcendentals per output element.
    transcendentals = 2 * B * sum(dims[1:])
    bytes_accessed = (
        xf.size * xf.dtype.itemsize
        + sum(w.size * w.dtype.itemsize + b.size * b.dtype.itemsize
              for (w, b) in used)
        + B * d_out * jnp.dtype(out_dtype).itemsize
    )

    return pl.pallas_call(
        kernel,
        out_shape=out_shape,
        grid=grid,
        in_specs=in_specs,
        out_specs=out_specs,
        compiler_params=pltpu.CompilerParams(
            dimension_semantics=("parallel",),   # v7x: shard batch over 2 TCs
            vmem_limit_bytes=32 * 1024 * 1024,   # safe on v7x's 64 MiB VMEM
        ),
        cost_estimate=pl.CostEstimate(
            flops=flops,
            transcendentals=transcendentals,
            bytes_accessed=bytes_accessed,
        ),
    )(*operands)


# ---------------------------------------------------------------------------
# Parameter init (PyTorch nn.Linear-style), stored in kernel-friendly layout
# ---------------------------------------------------------------------------
def init_encoder_params(key, in_features, out_features):
    """Returns kernel params (w [in,out] bf16, b [1,out] f32) and the
    PyTorch-layout f32 reference copies (w_pt [out,in], b [out])."""
    kw, kb = jax.random.split(key)
    bound = 1.0 / float(in_features) ** 0.5
    w_pt = jax.random.uniform(kw, (out_features, in_features), jnp.float32,
                              -bound, bound)
    b = jax.random.uniform(kb, (out_features,), jnp.float32, -bound, bound)
    # Transpose ONCE at init (no per-call HBM transpose); bf16 for the MXU.
    w = jnp.transpose(w_pt).astype(jnp.bfloat16)      # [in, out]
    return (w, b.reshape(1, out_features)), (w_pt, b)


# ---------------------------------------------------------------------------
# Demo / self-check
# ---------------------------------------------------------------------------
if __name__ == "__main__":
    # Small shapes consistent with the module; feature widths are multiples of
    # 128 (lane width), batch tile ends up 16 (multiple of 8/16 sublanes).
    B, C, H, W = 16, 4, 16, 16
    dims = (C * H * W, 512, 256, 128, 128)   # 1024 -> 512 -> 256 -> 128 -> 128

    root = jax.random.PRNGKey(0)
    k_x, *k_layers = jax.random.split(root, 1 + 4)

    x = jax.random.normal(k_x, (B, C, H, W), jnp.float32)

    params = []       # kernel-layout:   (w [in,out] bf16, b [1,out] f32)
    params_ref = []   # PyTorch-layout:  (w [out,in] f32,  b [out]   f32)
    for li in range(4):
        p, p_ref = init_encoder_params(k_layers[li], dims[li], dims[li + 1])
        params.append(p)
        params_ref.append(p_ref)

    # flagx=False: full 4-layer stack, fused into one pallas_call.
    out4 = jax.block_until_ready(
        stacked_autoencoder_forward(x, params, flagx=False))
    # flagx=True: first two encoder layers only.
    out2 = jax.block_until_ready(
        stacked_autoencoder_forward(x, params, flagx=True))

    # Plain-JAX f32 reference (same math as the PyTorch forward).
    h = x.reshape(B, -1)
    refs = []
    for (w_pt, b) in params_ref:
        h = jax.nn.sigmoid(h @ w_pt.T + b)
        refs.append(h)

    assert out4.shape == (B, dims[4])
    assert out2.shape == (B, dims[2])
    # Kernel uses bf16 matmul inputs (f32 accumulation) and an approx EUP
    # reciprocal; compare against the all-f32 reference with a tolerance that
    # covers the bf16 input rounding.
    err4 = float(jnp.max(jnp.abs(out4 - refs[3])))
    err2 = float(jnp.max(jnp.abs(out2 - refs[1])))
    assert err4 < 2e-2, err4
    assert err2 < 2e-2, err2

    print("KERNEL_OK")
</pallas_src>

<mosaic_0001>
module attributes {stable_mosaic.version = 11 : i64} {
  func.func @stacked_ae4_kernel(%arg0: i32, %arg1: memref<16x1024xf32, #tpu.memory_space<vmem>>, %arg2: memref<1024x512xbf16, #tpu.memory_space<vmem>>, %arg3: memref<1x512xf32, #tpu.memory_space<vmem>>, %arg4: memref<512x256xbf16, #tpu.memory_space<vmem>>, %arg5: memref<1x256xf32, #tpu.memory_space<vmem>>, %arg6: memref<256x128xbf16, #tpu.memory_space<vmem>>, %arg7: memref<1x128xf32, #tpu.memory_space<vmem>>, %arg8: memref<128x128xbf16, #tpu.memory_space<vmem>>, %arg9: memref<1x128xf32, #tpu.memory_space<vmem>>, %arg10: memref<16x128xf32, #tpu.memory_space<vmem>>) attributes {dimension_semantics = [#tpu.dimension_semantics<parallel>], iteration_bounds = array<i64: 1>, scalar_prefetch = 0 : i64, scratch_operands = 0 : i64, tpu.core_type = #tpu.core_type<tc>, window_params = [{transform_indices = @transform_0, window_bounds = array<i64: 16, 1024>}, {pipeline_mode = #tpu.pipeline_mode<synchronous>, transform_indices = @transform_1, window_bounds = array<i64: 1024, 512>}, {pipeline_mode = #tpu.pipeline_mode<synchronous>, transform_indices = @transform_2, window_bounds = array<i64: 1, 512>}, {pipeline_mode = #tpu.pipeline_mode<synchronous>, transform_indices = @transform_3, window_bounds = array<i64: 512, 256>}, {pipeline_mode = #tpu.pipeline_mode<synchronous>, transform_indices = @transform_4, window_bounds = array<i64: 1, 256>}, {pipeline_mode = #tpu.pipeline_mode<synchronous>, transform_indices = @transform_5, window_bounds = array<i64: 256, 128>}, {pipeline_mode = #tpu.pipeline_mode<synchronous>, transform_indices = @transform_6, window_bounds = array<i64: 1, 128>}, {pipeline_mode = #tpu.pipeline_mode<synchronous>, transform_indices = @transform_7, window_bounds = array<i64: 128, 128>}, {pipeline_mode = #tpu.pipeline_mode<synchronous>, transform_indices = @transform_8, window_bounds = array<i64: 1, 128>}, {transform_indices = @transform_9, window_bounds = array<i64: 16, 128>}]} {
    %c0 = arith.constant 0 : index
    %c0_0 = arith.constant 0 : index
    %0 = vector.load %arg1[%c0, %c0_0] : memref<16x1024xf32, #tpu.memory_space<vmem>>, vector<16x1024xf32>
    %1 = arith.truncf %0 : vector<16x1024xf32> to vector<16x1024xbf16>
    %c0_1 = arith.constant 0 : index
    %c0_2 = arith.constant 0 : index
    %2 = vector.load %arg2[%c0_1, %c0_2] : memref<1024x512xbf16, #tpu.memory_space<vmem>>, vector<1024x512xbf16>
    %cst = arith.constant dense<0.000000e+00> : vector<16x512xf32>
    %3 = tpu.matmul %1, %2, %cst {dimension_numbers = #tpu.dot_dimension_numbers<[1], [0], [0], [1], [0, 0, 1, 1], [], []>} : vector<16x1024xbf16>, vector<1024x512xbf16>, vector<16x512xf32> -> vector<16x512xf32>
    %c0_3 = arith.constant 0 : index
    %c0_4 = arith.constant 0 : index
    %4 = vector.load %arg3[%c0_3, %c0_4] : memref<1x512xf32, #tpu.memory_space<vmem>>, vector<1x512xf32>
    %5 = vector.broadcast %4 : vector<1x512xf32> to vector<16x512xf32>
    %6 = arith.addf %3, %5 : vector<16x512xf32>
    %cst_5 = arith.constant 0.000000e+00 : f32
    %7 = vector.broadcast %cst_5 : f32 to vector<16x512xf32>
    %8 = arith.subf %7, %6 : vector<16x512xf32>
    %9 = math.exp %8 : vector<16x512xf32>
    %cst_6 = arith.constant 1.000000e+00 : f32
    %10 = vector.broadcast %cst_6 : f32 to vector<16x512xf32>
    %11 = arith.addf %10, %9 : vector<16x512xf32>
    %12 = tpu.reciprocal %11 {approx = true} : vector<16x512xf32> -> vector<16x512xf32>
    %13 = arith.truncf %12 : vector<16x512xf32> to vector<16x512xbf16>
    %c0_7 = arith.constant 0 : index
    %c0_8 = arith.constant 0 : index
    %14 = vector.load %arg4[%c0_7, %c0_8] : memref<512x256xbf16, #tpu.memory_space<vmem>>, vector<512x256xbf16>
    %cst_9 = arith.constant dense<0.000000e+00> : vector<16x256xf32>
    %15 = tpu.matmul %13, %14, %cst_9 {dimension_numbers = #tpu.dot_dimension_numbers<[1], [0], [0], [1], [0, 0, 1, 1], [], []>} : vector<16x512xbf16>, vector<512x256xbf16>, vector<16x256xf32> -> vector<16x256xf32>
    %c0_10 = arith.constant 0 : index
    %c0_11 = arith.constant 0 : index
    %16 = vector.load %arg5[%c0_10, %c0_11] : memref<1x256xf32, #tpu.memory_space<vmem>>, vector<1x256xf32>
    %17 = vector.broadcast %16 : vector<1x256xf32> to vector<16x256xf32>
    %18 = arith.addf %15, %17 : vector<16x256xf32>
    %cst_12 = arith.constant 0.000000e+00 : f32
    %19 = vector.broadcast %cst_12 : f32 to vector<16x256xf32>
    %20 = arith.subf %19, %18 : vector<16x256xf32>
    %21 = math.exp %20 : vector<16x256xf32>
    %cst_13 = arith.constant 1.000000e+00 : f32
    %22 = vector.broadcast %cst_13 : f32 to vector<16x256xf32>
    %23 = arith.addf %22, %21 : vector<16x256xf32>
    %24 = tpu.reciprocal %23 {approx = true} : vector<16x256xf32> -> vector<16x256xf32>
    %25 = arith.truncf %24 : vector<16x256xf32> to vector<16x256xbf16>
    %c0_14 = arith.constant 0 : index
    %c0_15 = arith.constant 0 : index
    %26 = vector.load %arg6[%c0_14, %c0_15] : memref<256x128xbf16, #tpu.memory_space<vmem>>, vector<256x128xbf16>
    %cst_16 = arith.constant dense<0.000000e+00> : vector<16x128xf32>
    %27 = tpu.matmul %25, %26, %cst_16 {dimension_numbers = #tpu.dot_dimension_numbers<[1], [0], [0], [1], [0, 0, 1, 1], [], []>} : vector<16x256xbf16>, vector<256x128xbf16>, vector<16x128xf32> -> vector<16x128xf32>
    %c0_17 = arith.constant 0 : index
    %c0_18 = arith.constant 0 : index
    %28 = vector.load %arg7[%c0_17, %c0_18] : memref<1x128xf32, #tpu.memory_space<vmem>>, vector<1x128xf32>
    %29 = vector.broadcast %28 : vector<1x128xf32> to vector<16x128xf32>
    %30 = arith.addf %27, %29 : vector<16x128xf32>
    %cst_19 = arith.constant 0.000000e+00 : f32
    %31 = vector.broadcast %cst_19 : f32 to vector<16x128xf32>
    %32 = arith.subf %31, %30 : vector<16x128xf32>
    %33 = math.exp %32 : vector<16x128xf32>
    %cst_20 = arith.constant 1.000000e+00 : f32
    %34 = vector.broadcast %cst_20 : f32 to vector<16x128xf32>
    %35 = arith.addf %34, %33 : vector<16x128xf32>
    %36 = tpu.reciprocal %35 {approx = true} : vector<16x128xf32> -> vector<16x128xf32>
    %37 = arith.truncf %36 : vector<16x128xf32> to vector<16x128xbf16>
    %c0_21 = arith.constant 0 : index
    %c0_22 = arith.constant 0 : index
    %38 = vector.load %arg8[%c0_21, %c0_22] : memref<128x128xbf16, #tpu.memory_space<vmem>>, vector<128x128xbf16>
    %cst_23 = arith.constant dense<0.000000e+00> : vector<16x128xf32>
    %39 = tpu.matmul %37, %38, %cst_23 {dimension_numbers = #tpu.dot_dimension_numbers<[1], [0], [0], [1], [0, 0, 1, 1], [], []>} : vector<16x128xbf16>, vector<128x128xbf16>, vector<16x128xf32> -> vector<16x128xf32>
    %c0_24 = arith.constant 0 : index
    %c0_25 = arith.constant 0 : index
    %40 = vector.load %arg9[%c0_24, %c0_25] : memref<1x128xf32, #tpu.memory_space<vmem>>, vector<1x128xf32>
    %41 = vector.broadcast %40 : vector<1x128xf32> to vector<16x128xf32>
    %42 = arith.addf %39, %41 : vector<16x128xf32>
    %cst_26 = arith.constant 0.000000e+00 : f32
    %43 = vector.broadcast %cst_26 : f32 to vector<16x128xf32>
    %44 = arith.subf %43, %42 : vector<16x128xf32>
    %45 = math.exp %44 : vector<16x128xf32>
    %cst_27 = arith.constant 1.000000e+00 : f32
    %46 = vector.broadcast %cst_27 : f32 to vector<16x128xf32>
    %47 = arith.addf %46, %45 : vector<16x128xf32>
    %48 = tpu.reciprocal %47 {approx = true} : vector<16x128xf32> -> vector<16x128xf32>
    %c0_28 = arith.constant 0 : index
    %c0_29 = arith.constant 0 : index
    %49 = vector.load %arg10[%c0_28, %c0_29] : memref<16x128xf32, #tpu.memory_space<vmem>>, vector<16x128xf32>
    tpu.vector_store %arg10[%c0_28, %c0_29], %48 {strides = array<i32>} : memref<16x128xf32, #tpu.memory_space<vmem>>, vector<16x128xf32>,
    return
  }
  func.func @transform_0(%arg0: i32) -> (i32, i32) {
    %c0_i32 = arith.constant 0 : i32
    %c0_i32_0 = arith.constant 0 : i32
    return %arg0, %c0_i32 : i32, i32
  }
  func.func @transform_1(%arg0: i32) -> (i32, i32) {
    %c0_i32 = arith.constant 0 : i32
    %c0_i32_0 = arith.constant 0 : i32
    %c0_i32_1 = arith.constant 0 : i32
    return %c0_i32, %c0_i32_0 : i32, i32
  }
  func.func @transform_2(%arg0: i32) -> (i32, i32) {
    %c0_i32 = arith.constant 0 : i32
    %c0_i32_0 = arith.constant 0 : i32
    %c0_i32_1 = arith.constant 0 : i32
    return %c0_i32, %c0_i32_0 : i32, i32
  }
  func.func @transform_3(%arg0: i32) -> (i32, i32) {
    %c0_i32 = arith.constant 0 : i32
    %c0_i32_0 = arith.constant 0 : i32
    %c0_i32_1 = arith.constant 0 : i32
    return %c0_i32, %c0_i32_0 : i32, i32
  }
  func.func @transform_4(%arg0: i32) -> (i32, i32) {
    %c0_i32 = arith.constant 0 : i32
    %c0_i32_0 = arith.constant 0 : i32
    %c0_i32_1 = arith.constant 0 : i32
    return %c0_i32, %c0_i32_0 : i32, i32
  }
  func.func @transform_5(%arg0: i32) -> (i32, i32) {
    %c0_i32 = arith.constant 0 : i32
    %c0_i32_0 = arith.constant 0 : i32
    %c0_i32_1 = arith.constant 0 : i32
    return %c0_i32, %c0_i32_0 : i32, i32
  }
  func.func @transform_6(%arg0: i32) -> (i32, i32) {
    %c0_i32 = arith.constant 0 : i32
    %c0_i32_0 = arith.constant 0 : i32
    %c0_i32_1 = arith.constant 0 : i32
    return %c0_i32, %c0_i32_0 : i32, i32
  }
  func.func @transform_7(%arg0: i32) -> (i32, i32) {
    %c0_i32 = arith.constant 0 : i32
    %c0_i32_0 = arith.constant 0 : i32
    %c0_i32_1 = arith.constant 0 : i32
    return %c0_i32, %c0_i32_0 : i32, i32
  }
  func.func @transform_8(%arg0: i32) -> (i32, i32) {
    %c0_i32 = arith.constant 0 : i32
    %c0_i32_0 = arith.constant 0 : i32
    %c0_i32_1 = arith.constant 0 : i32
    return %c0_i32, %c0_i32_0 : i32, i32
  }
  func.func @transform_9(%arg0: i32) -> (i32, i32) {
    %c0_i32 = arith.constant 0 : i32
    %c0_i32_0 = arith.constant 0 : i32
    return %arg0, %c0_i32 : i32, i32
  }
}

</mosaic_0001>

<llo_original>
// kernel: tpu_custom_call.1
$region0: #{tpu_custom_call.1}
  #allocation0 [shape = 'u32[]', space=smem, size = 0x4, offset = 0x4, fixed_abs, tag = 'smem constant byte address 0x4 - core index']
  #allocation1 [shape = 'u32[72,128]{1,0:T(1,128)}', space=vmem, size = 0x9000, scoped, tag = 'internal scratch']
  %s0 = inlined_call_operand.hbm [shape: f32[16,1024], index: 0, kind: input, shape index: {}]
  %s1 = inlined_call_operand.hbm [shape: bf16[1024,512], index: 1, kind: input, shape index: {}]
  %s2 = inlined_call_operand.hbm [shape: f32[1,512], index: 2, kind: input, shape index: {}]
  %s3 = inlined_call_operand.hbm [shape: bf16[512,256], index: 3, kind: input, shape index: {}]
  %s4 = inlined_call_operand.vmem [shape: f32[1,256], index: 4, kind: input, shape index: {}]
  %s5 = inlined_call_operand.hbm [shape: bf16[256,128], index: 5, kind: input, shape index: {}]
  %s6 = inlined_call_operand.vmem [shape: f32[1,128], index: 6, kind: input, shape index: {}]
  %s7 = inlined_call_operand.hbm [shape: bf16[128,128], index: 7, kind: input, shape index: {}]
  %s8 = inlined_call_operand.vmem [shape: f32[1,128], index: 8, kind: input, shape index: {}]
  %s9 = inlined_call_operand.hbm [shape: f32[16,128], index: 9, kind: output, shape index: {}]
  %s10 = sld [smem:[#allocation0]]
  $region70: #{tpu_custom_call.1} parent=0
    _
  %s12 = ssub.s32 1, %s10
  %s13 = scalar_select 0, %s12, %s10
  $region1: #{tpu_custom_call.1} parent=0
    #allocation2 [shape = 'u8[65536]{0}', space=vmem, size = 0x10000, scoped, tag = 'input window, operand 0, single buffered']
    #allocation3 [shape = 's32[1]{0}', space=sflag, size = 0x4, scoped, tag = 'scoped memory for tpu_custom_call.1']
    #allocation4 [shape = 's32[1]{0}', space=sflag, size = 0x4, scoped, tag = 'scoped memory for tpu_custom_call.1']
    #allocation5 [shape = 'u8[1048576]{0}', space=vmem, size = 0x100000, scoped, tag = 'input window, operand 1, single buffered']
    #allocation6 [shape = 's32[1]{0}', space=sflag, size = 0x4, scoped, tag = 'scoped memory for tpu_custom_call.1']
    #allocation7 [shape = 'u8[2048]{0}', space=vmem, size = 0x800, scoped, tag = 'input window, operand 2, single buffered']
    #allocation8 [shape = 'u8[262144]{0}', space=vmem, size = 0x40000, scoped, tag = 'input window, operand 3, single buffered']
    #allocation9 [shape = 's32[1]{0}', space=sflag, size = 0x4, scoped, tag = 'scoped memory for tpu_custom_call.1']
    #allocation10 [shape = 'u8[65536]{0}', space=vmem, size = 0x10000, scoped, tag = 'input window, operand 5, single buffered']
    #allocation11 [shape = 'u8[32768]{0}', space=vmem, size = 0x8000, scoped, tag = 'input window, operand 7, single buffered']
    #allocation12 [shape = 's32[1]{0}', space=sflag, size = 0x4, scoped, tag = 'scoped memory for tpu_custom_call.1']
    #allocation13 [shape = 'u8[8192]{0}', space=vmem, size = 0x2000, scoped, tag = 'output window, operand 0, single buffered']
    %14 = vsyncpa [#allocation3], 0
    %15 = vsyncpa [#allocation6], 0
    %16 = vsyncpa [#allocation9], 0
    %17 = vsyncpa [#allocation12], 0
    %18 = vsyncpa [#allocation4], 0
    // Predicated region
    $region2: #{tpu_custom_call.1} parent=1 // pred_check
      _
    $region3: #{tpu_custom_call.1} parent=1 // pred_check_branch
      %20 = sbr.rel (0) target = $region5
    $region4: #{tpu_custom_call.1} parent=1 // pred_region
      %22 = vsyncadd [#allocation3], 0
      %s23 = sshll.u32 %s0, 4
      %s24 = int_to_ptr.hbm [resolvable:$true] %s23
      %s25 = sshll.u32 [#allocation2], 4
      %s26 = int_to_ptr.vmem [resolvable:$true] %s25
      %31 = dma.hbm_to_vmem [thread:$0]  %s24, 2048, %s26, [#allocation3], 1024, 1024, 64
    $region5: #{tpu_custom_call.1} parent=1 // pred_fallthru
      _
    // Predicated region
    $region6: #{tpu_custom_call.1} parent=1 // pred_check
      _
    $region7: #{tpu_custom_call.1} parent=1 // pred_check_branch
      %33 = sbr.rel (0) target = $region9
    $region8: #{tpu_custom_call.1} parent=1 // pred_region
      %35 = vsyncadd [#allocation6], 0
      %s36 = sshll.u32 %s1, 4
      %s37 = int_to_ptr.hbm [resolvable:$true] %s36
      %s38 = sshll.u32 [#allocation5], 4
      %s39 = int_to_ptr.vmem [resolvable:$true] %s38
      %44 = dma.hbm_to_vmem [thread:$0]  %s37, 32768, %s39, [#allocation6], 256, 256, 16
    $region9: #{tpu_custom_call.1} parent=1 // pred_fallthru
      _
    // Predicated region
    $region10: #{tpu_custom_call.1} parent=1 // pred_check
      _
    $region11: #{tpu_custom_call.1} parent=1 // pred_check_branch
      %46 = sbr.rel (0) target = $region13
    $region12: #{tpu_custom_call.1} parent=1 // pred_region
      %48 = vsyncadd [#allocation6], 0
      %s50 = sshll.u32 %s2, 4
      %s51 = int_to_ptr.hbm [resolvable:$true] %s50
      %s52 = sshll.u32 [#allocation7], 4
      %s53 = int_to_ptr.vmem [resolvable:$true] %s52
      %55 = dma.hbm_to_vmem [thread:$0]  %s51, 64, %s53, [#allocation6]
    $region13: #{tpu_custom_call.1} parent=1 // pred_fallthru
      _
    // Predicated region
    $region14: #{tpu_custom_call.1} parent=1 // pred_check
      _
    $region15: #{tpu_custom_call.1} parent=1 // pred_check_branch
      %57 = sbr.rel (0) target = $region17
    $region16: #{tpu_custom_call.1} parent=1 // pred_region
      %59 = vsyncadd [#allocation9], 0
      %s60 = sshll.u32 %s3, 4
      %s61 = int_to_ptr.hbm [resolvable:$true] %s60
      %s62 = sshll.u32 [#allocation8], 4
      %s63 = int_to_ptr.vmem [resolvable:$true] %s62
      %68 = dma.hbm_to_vmem [thread:$0]  %s61, 8192, %s63, [#allocation9], 128, 128, 8
    $region17: #{tpu_custom_call.1} parent=1 // pred_fallthru
      _
    // Predicated region
    $region18: #{tpu_custom_call.1} parent=1 // pred_check
      _
    $region19: #{tpu_custom_call.1} parent=1 // pred_check_branch
      %70 = sbr.rel (0) target = $region21
    $region20: #{tpu_custom_call.1} parent=1 // pred_region
      _
    $region21: #{tpu_custom_call.1} parent=1 // pred_fallthru
      _
    // Predicated region
    $region22: #{tpu_custom_call.1} parent=1 // pred_check
      _
    $region23: #{tpu_custom_call.1} parent=1 // pred_check_branch
      %72 = sbr.rel (0) target = $region25
    $region24: #{tpu_custom_call.1} parent=1 // pred_region
      %74 = vsyncadd [#allocation9], 0
      %s75 = sshll.u32 %s5, 4
      %s76 = int_to_ptr.hbm [resolvable:$true] %s75
      %s77 = sshll.u32 [#allocation10], 4
      %s78 = int_to_ptr.vmem [resolvable:$true] %s77
      %83 = dma.hbm_to_vmem [thread:$0]  %s76, 2048, %s78, [#allocation9], 64, 64, 4
    $region25: #{tpu_custom_call.1} parent=1 // pred_fallthru
      _
    // Predicated region
    $region26: #{tpu_custom_call.1} parent=1 // pred_check
      _
    $region27: #{tpu_custom_call.1} parent=1 // pred_check_branch
      %85 = sbr.rel (0) target = $region29
    $region28: #{tpu_custom_call.1} parent=1 // pred_region
      _
    $region29: #{tpu_custom_call.1} parent=1 // pred_fallthru
      _
    // Predicated region
    $region30: #{tpu_custom_call.1} parent=1 // pred_check
      _
    $region31: #{tpu_custom_call.1} parent=1 // pred_check_branch
      %87 = sbr.rel (0) target = $region33
    $region32: #{tpu_custom_call.1} parent=1 // pred_region
      %89 = vsyncadd [#allocation12], 0
      %s90 = sshll.u32 %s7, 4
      %s91 = int_to_ptr.hbm [resolvable:$true] %s90
      %s92 = sshll.u32 [#allocation11], 4
      %s93 = int_to_ptr.vmem [resolvable:$true] %s92
      %98 = dma.hbm_to_vmem [thread:$0]  %s91, 1024, %s93, [#allocation12], 64, 64, 4
    $region33: #{tpu_custom_call.1} parent=1 // pred_fallthru
      _
    // Predicated region
    $region34: #{tpu_custom_call.1} parent=1 // pred_check
      _
    $region35: #{tpu_custom_call.1} parent=1 // pred_check_branch
      %100 = sbr.rel (0) target = $region37
    $region36: #{tpu_custom_call.1} parent=1 // pred_region
      _
    $region37: #{tpu_custom_call.1} parent=1 // pred_fallthru
      _
    // Predicated region
    $region38: #{tpu_custom_call.1} parent=1 // pred_check
      _
    $region39: #{tpu_custom_call.1} parent=1 // pred_check_branch
      %102 = sbr.rel (0) target = $region41
    $region40: #{tpu_custom_call.1} parent=1 // pred_region
      %104 = dma.done [#allocation3], 2048
    $region41: #{tpu_custom_call.1} parent=1 // pred_fallthru
      _
    // Predicated region
    $region42: #{tpu_custom_call.1} parent=1 // pred_check
      _
    $region43: #{tpu_custom_call.1} parent=1 // pred_check_branch
      %106 = sbr.rel (0) target = $region45
    $region44: #{tpu_custom_call.1} parent=1 // pred_region
      %108 = dma.done [#allocation6], 32768
    $region45: #{tpu_custom_call.1} parent=1 // pred_fallthru
      _
    // Predicated region
    $region46: #{tpu_custom_call.1} parent=1 // pred_check
      _
    $region47: #{tpu_custom_call.1} parent=1 // pred_check_branch
      %110 = sbr.rel (0) target = $region49
    $region48: #{tpu_custom_call.1} parent=1 // pred_region
      %112 = dma.done [#allocation6], 64
    $region49: #{tpu_custom_call.1} parent=1 // pred_fallthru
      _
    // Predicated region
    $region50: #{tpu_custom_call.1} parent=1 // pred_check
      _
    $region51: #{tpu_custom_call.1} parent=1 // pred_check_branch
      %114 = sbr.rel (0) target = $region53
    $region52: #{tpu_custom_call.1} parent=1 // pred_region
      %116 = dma.done [#allocation9], 8192
    $region53: #{tpu_custom_call.1} parent=1 // pred_fallthru
      _
    // Predicated region
    $region54: #{tpu_custom_call.1} parent=1 // pred_check
      _
    $region55: #{tpu_custom_call.1} parent=1 // pred_check_branch
      %118 = sbr.rel (0) target = $region57
    $region56: #{tpu_custom_call.1} parent=1 // pred_region
      %120 = dma.done [#allocation9], 2048
    $region57: #{tpu_custom_call.1} parent=1 // pred_fallthru
      _
    // Predicated region
    $region58: #{tpu_custom_call.1} parent=1 // pred_check
      _
    $region59: #{tpu_custom_call.1} parent=1 // pred_check_branch
      %122 = sbr.rel (0) target = $region61
    $region60: #{tpu_custom_call.1} parent=1 // pred_region
      %124 = dma.done [#allocation12], 1024
    $region61: #{tpu_custom_call.1} parent=1 // pred_fallthru
      _
    %v125 = vld [vmem:[#allocation2] sm:$0xff]
    %v126 = vld [vmem:[#allocation2 + $0x8] sm:$0xff]
    %v127 = vld [vmem:[#allocation2 + $0x10] sm:$0xff]
    %v128 = vld [vmem:[#allocation2 + $0x18] sm:$0xff]
    %v129 = vld [vmem:[#allocation2 + $0x20] sm:$0xff]
    %v130 = vld [vmem:[#allocation2 + $0x28] sm:$0xff]
    %v131 = vld [vmem:[#allocation2 + $0x30] sm:$0xff]
    %v132 = vld [vmem:[#allocation2 + $0x38] sm:$0xff]
    %v133 = vld [vmem:[#allocation2 + $0x40] sm:$0xff]
    %v134 = vld [vmem:[#allocation2 + $0x48] sm:$0xff]
    %v135 = vld [vmem:[#allocation2 + $0x50] sm:$0xff]
    %v136 = vld [vmem:[#allocation2 + $0x58] sm:$0xff]
    %v137 = vld [vmem:[#allocation2 + $0x60] sm:$0xff]
    %v138 = vld [vmem:[#allocation2 + $0x68] sm:$0xff]
    %v139 = vld [vmem:[#allocation2 + $0x70] sm:$0xff]
    %v140 = vld [vmem:[#allocation2 + $0x78] sm:$0xff]
    %v141 = vpack.c.bf16 %v133, %v125
    %v142 = vpack.c.bf16 %v134, %v126
    %v143 = vpack.c.bf16 %v135, %v127
    %v144 = vpack.c.bf16 %v136, %v128
    %v145 = vpack.c.bf16 %v137, %v129
    %v146 = vpack.c.bf16 %v138, %v130
    %v147 = vpack.c.bf16 %v139, %v131
    %v148 = vpack.c.bf16 %v140, %v132
    %v149 = vld [vmem:[#allocation5] sm:$0xff]
    %v150 = vld [vmem:[#allocation5 + $0x8] sm:$0xff]
    %v151 = vld [vmem:[#allocation5 + $0x10] sm:$0xff]
    %v152 = vld [vmem:[#allocation5 + $0x18] sm:$0xff]
    %v153 = vld [vmem:[#allocation5 + $0x20] sm:$0xff]
    %v154 = vld [vmem:[#allocation5 + $0x28] sm:$0xff]
    %v155 = vld [vmem:[#allocation5 + $0x30] sm:$0xff]
    %v156 = vld [vmem:[#allocation5 + $0x38] sm:$0xff]
    %v157 = vld [vmem:[#allocation5 + $0x40] sm:$0xff]
    %v158 = vld [vmem:[#allocation5 + $0x48] sm:$0xff]
    %v159 = vld [vmem:[#allocation5 + $0x50] sm:$0xff]
    %v160 = vld [vmem:[#allocation5 + $0x58] sm:$0xff]
    %v161 = vld [vmem:[#allocation5 + $0x60] sm:$0xff]
    %v162 = vld [vmem:[#allocation5 + $0x68] sm:$0xff]
    %v163 = vld [vmem:[#allocation5 + $0x70] sm:$0xff]
    %v164 = vld [vmem:[#allocation5 + $0x78] sm:$0xff]
    %v165 = vld [vmem:[#allocation5 + $0x80] sm:$0xff]
    %v166 = vld [vmem:[#allocation5 + $0x88] sm:$0xff]
    %v167 = vld [vmem:[#allocation5 + $0x90] sm:$0xff]
    %v168 = vld [vmem:[#allocation5 + $0x98] sm:$0xff]
    %v169 = vld [vmem:[#allocation5 + $0xa0] sm:$0xff]
    %v170 = vld [vmem:[#allocation5 + $0xa8] sm:$0xff]
    %v171 = vld [vmem:[#allocation5 + $0xb0] sm:$0xff]
    %v172 = vld [vmem:[#allocation5 + $0xb8] sm:$0xff]
    %v173 = vld [vmem:[#allocation5 + $0xc0] sm:$0xff]
    %v174 = vld [vmem:[#allocation5 + $0xc8] sm:$0xff]
    %v175 = vld [vmem:[#allocation5 + $0xd0] sm:$0xff]
    %v176 = vld [vmem:[#allocation5 + $0xd8] sm:$0xff]
    %v177 = vld [vmem:[#allocation5 + $0xe0] sm:$0xff]
    %v178 = vld [vmem:[#allocation5 + $0xe8] sm:$0xff]
    %v179 = vld [vmem:[#allocation5 + $0xf0] sm:$0xff]
    %v180 = vld [vmem:[#allocation5 + $0xf8] sm:$0xff]
    %v181 = vld [vmem:[#allocation5 + $0x100] sm:$0xff]
    %v182 = vld [vmem:[#allocation5 + $0x108] sm:$0xff]
    %v183 = vld [vmem:[#allocation5 + $0x110] sm:$0xff]
    %v184 = vld [vmem:[#allocation5 + $0x118] sm:$0xff]
    %v185 = vld [vmem:[#allocation5 + $0x120] sm:$0xff]
    %v186 = vld [vmem:[#allocation5 + $0x128] sm:$0xff]
    %v187 = vld [vmem:[#allocation5 + $0x130] sm:$0xff]
    %v188 = vld [vmem:[#allocation5 + $0x138] sm:$0xff]
    %v189 = vld [vmem:[#allocation5 + $0x140] sm:$0xff]
    %v190 = vld [vmem:[#allocation5 + $0x148] sm:$0xff]
    %v191 = vld [vmem:[#allocation5 + $0x150] sm:$0xff]
    %v192 = vld [vmem:[#allocation5 + $0x158] sm:$0xff]
    %v193 = vld [vmem:[#allocation5 + $0x160] sm:$0xff]
    %v194 = vld [vmem:[#allocation5 + $0x168] sm:$0xff]
    %v195 = vld [vmem:[#allocation5 + $0x170] sm:$0xff]
    %v196 = vld [vmem:[#allocation5 + $0x178] sm:$0xff]
    %v197 = vld [vmem:[#allocation5 + $0x180] sm:$0xff]
    %v198 = vld [vmem:[#allocation5 + $0x188] sm:$0xff]
    %v199 = vld [vmem:[#allocation5 + $0x190] sm:$0xff]
    %v200 = vld [vmem:[#allocation5 + $0x198] sm:$0xff]
    %v201 = vld [vmem:[#allocation5 + $0x1a0] sm:$0xff]
    %v202 = vld [vmem:[#allocation5 + $0x1a8] sm:$0xff]
    %v203 = vld [vmem:[#allocation5 + $0x1b0] sm:$0xff]
    %v204 = vld [vmem:[#allocation5 + $0x1b8] sm:$0xff]
    %v205 = vld [vmem:[#allocation5 + $0x1c0] sm:$0xff]
    %v206 = vld [vmem:[#allocation5 + $0x1c8] sm:$0xff]
    %v207 = vld [vmem:[#allocation5 + $0x1d0] sm:$0xff]
    %v208 = vld [vmem:[#allocation5 + $0x1d8] sm:$0xff]
    %v209 = vld [vmem:[#allocation5 + $0x1e0] sm:$0xff]
    %v210 = vld [vmem:[#allocation5 + $0x1e8] sm:$0xff]
    %v211 = vld [vmem:[#allocation5 + $0x1f0] sm:$0xff]
    %v212 = vld [vmem:[#allocation5 + $0x1f8] sm:$0xff]
    %v213 = vld [vmem:[#allocation5 + $0x200] sm:$0xff]
    %v214 = vld [vmem:[#allocation5 + $0x208] sm:$0xff]
    %v215 = vld [vmem:[#allocation5 + $0x210] sm:$0xff]
    %v216 = vld [vmem:[#allocation5 + $0x218] sm:$0xff]
    %v217 = vld [vmem:[#allocation5 + $0x220] sm:$0xff]
    %v218 = vld [vmem:[#allocation5 + $0x228] sm:$0xff]
    %v219 = vld [vmem:[#allocation5 + $0x230] sm:$0xff]
    %v220 = vld [vmem:[#allocation5 + $0x238] sm:$0xff]
    %v221 = vld [vmem:[#allocation5 + $0x240] sm:$0xff]
    %v222 = vld [vmem:[#allocation5 + $0x248] sm:$0xff]
    %v223 = vld [vmem:[#allocation5 + $0x250] sm:$0xff]
    %v224 = vld [vmem:[#allocation5 + $0x258] sm:$0xff]
    %v225 = vld [vmem:[#allocation5 + $0x260] sm:$0xff]
    %v226 = vld [vmem:[#allocation5 + $0x268] sm:$0xff]
    %v227 = vld [vmem:[#allocation5 + $0x270] sm:$0xff]
    %v228 = vld [vmem:[#allocation5 + $0x278] sm:$0xff]
    %v229 = vld [vmem:[#allocation5 + $0x280] sm:$0xff]
    %v230 = vld [vmem:[#allocation5 + $0x288] sm:$0xff]
    %v231 = vld [vmem:[#allocation5 + $0x290] sm:$0xff]
    %v232 = vld [vmem:[#allocation5 + $0x298] sm:$0xff]
    %v233 = vld [vmem:[#allocation5 + $0x2a0] sm:$0xff]
    %v234 = vld [vmem:[#allocation5 + $0x2a8] sm:$0xff]
    %v235 = vld [vmem:[#allocation5 + $0x2b0] sm:$0xff]
    %v236 = vld [vmem:[#allocation5 + $0x2b8] sm:$0xff]
    %v237 = vld [vmem:[#allocation5 + $0x2c0] sm:$0xff]
    %v238 = vld [vmem:[#allocation5 + $0x2c8] sm:$0xff]
    %v239 = vld [vmem:[#allocation5 + $0x2d0] sm:$0xff]
    %v240 = vld [vmem:[#allocation5 + $0x2d8] sm:$0xff]
    %v241 = vld [vmem:[#allocation5 + $0x2e0] sm:$0xff]
    %v242 = vld [vmem:[#allocation5 + $0x2e8] sm:$0xff]
    %v243 = vld [vmem:[#allocation5 + $0x2f0] sm:$0xff]
    %v244 = vld [vmem:[#allocation5 + $0x2f8] sm:$0xff]
    %v245 = vld [vmem:[#allocation5 + $0x300] sm:$0xff]
    %v246 = vld [vmem:[#allocation5 + $0x308] sm:$0xff]
    %v247 = vld [vmem:[#allocation5 + $0x310] sm:$0xff]
    %v248 = vld [vmem:[#allocation5 + $0x318] sm:$0xff]
    %v249 = vld [vmem:[#allocation5 + $0x320] sm:$0xff]
    %v250 = vld [vmem:[#allocation5 + $0x328] sm:$0xff]
    %v251 = vld [vmem:[#allocation5 + $0x330] sm:$0xff]
    %v252 = vld [vmem:[#allocation5 + $0x338] sm:$0xff]
    %v253 = vld [vmem:[#allocation5 + $0x340] sm:$0xff]
    %v254 = vld [vmem:[#allocation5 + $0x348] sm:$0xff]
    %v255 = vld [vmem:[#allocation5 + $0x350] sm:$0xff]
    %v256 = vld [vmem:[#allocation5 + $0x358] sm:$0xff]
    %v257 = vld [vmem:[#allocation5 + $0x360] sm:$0xff]
    %v258 = vld [vmem:[#allocation5 + $0x368] sm:$0xff]
    %v259 = vld [vmem:[#allocation5 + $0x370] sm:$0xff]
    %v260 = vld [vmem:[#allocation5 + $0x378] sm:$0xff]
    %v261 = vld [vmem:[#allocation5 + $0x380] sm:$0xff]
    %v262 = vld [vmem:[#allocation5 + $0x388] sm:$0xff]
    %v263 = vld [vmem:[#allocation5 + $0x390] sm:$0xff]
    %v264 = vld [vmem:[#allocation5 + $0x398] sm:$0xff]
    %v265 = vld [vmem:[#allocation5 + $0x3a0] sm:$0xff]
    %v266 = vld [vmem:[#allocation5 + $0x3a8] sm:$0xff]
    %v267 = vld [vmem:[#allocation5 + $0x3b0] sm:$0xff]
    %v268 = vld [vmem:[#allocation5 + $0x3b8] sm:$0xff]
    %v269 = vld [vmem:[#allocation5 + $0x3c0] sm:$0xff]
    %v270 = vld [vmem:[#allocation5 + $0x3c8] sm:$0xff]
    %v271 = vld [vmem:[#allocation5 + $0x3d0] sm:$0xff]
    %v272 = vld [vmem:[#allocation5 + $0x3d8] sm:$0xff]
    %v273 = vld [vmem:[#allocation5 + $0x3e0] sm:$0xff]
    %v274 = vld [vmem:[#allocation5 + $0x3e8] sm:$0xff]
    %v275 = vld [vmem:[#allocation5 + $0x3f0] sm:$0xff]
    %v276 = vld [vmem:[#allocation5 + $0x3f8] sm:$0xff]
    %v277 = vld [vmem:[#allocation5 + $0x400] sm:$0xff]
    %v278 = vld [vmem:[#allocation5 + $0x408] sm:$0xff]
    %v279 = vld [vmem:[#allocation5 + $0x410] sm:$0xff]
    %v280 = vld [vmem:[#allocation5 + $0x418] sm:$0xff]
    %v281 = vld [vmem:[#allocation5 + $0x420] sm:$0xff]
    %v282 = vld [vmem:[#allocation5 + $0x428] sm:$0xff]
    %v283 = vld [vmem:[#allocation5 + $0x430] sm:$0xff]
    %v284 = vld [vmem:[#allocation5 + $0x438] sm:$0xff]
    %v285 = vld [vmem:[#allocation5 + $0x440] sm:$0xff]
    %v286 = vld [vmem:[#allocation5 + $0x448] sm:$0xff]
    %v287 = vld [vmem:[#allocation5 + $0x450] sm:$0xff]
    %v288 = vld [vmem:[#allocation5 + $0x458] sm:$0xff]
    %v289 = vld [vmem:[#allocation5 + $0x460] sm:$0xff]
    %v290 = vld [vmem:[#allocation5 + $0x468] sm:$0xff]
    %v291 = vld [vmem:[#allocation5 + $0x470] sm:$0xff]
    %v292 = vld [vmem:[#allocation5 + $0x478] sm:$0xff]
    %v293 = vld [vmem:[#allocation5 + $0x480] sm:$0xff]
    %v294 = vld [vmem:[#allocation5 + $0x488] sm:$0xff]
    %v295 = vld [vmem:[#allocation5 + $0x490] sm:$0xff]
    %v296 = vld [vmem:[#allocation5 + $0x498] sm:$0xff]
    %v297 = vld [vmem:[#allocation5 + $0x4a0] sm:$0xff]
    %v298 = vld [vmem:[#allocation5 + $0x4a8] sm:$0xff]
    %v299 = vld [vmem:[#allocation5 + $0x4b0] sm:$0xff]
    %v300 = vld [vmem:[#allocation5 + $0x4b8] sm:$0xff]
    %v301 = vld [vmem:[#allocation5 + $0x4c0] sm:$0xff]
    %v302 = vld [vmem:[#allocation5 + $0x4c8] sm:$0xff]
    %v303 = vld [vmem:[#allocation5 + $0x4d0] sm:$0xff]
    %v304 = vld [vmem:[#allocation5 + $0x4d8] sm:$0xff]
    %v305 = vld [vmem:[#allocation5 + $0x4e0] sm:$0xff]
    %v306 = vld [vmem:[#allocation5 + $0x4e8] sm:$0xff]
    %v307 = vld [vmem:[#allocation5 + $0x4f0] sm:$0xff]
    %v308 = vld [vmem:[#allocation5 + $0x4f8] sm:$0xff]
    %v309 = vld [vmem:[#allocation5 + $0x500] sm:$0xff]
    %v310 = vld [vmem:[#allocation5 + $0x508] sm:$0xff]
    %v311 = vld [vmem:[#allocation5 + $0x510] sm:$0xff]
    %v312 = vld [vmem:[#allocation5 + $0x518] sm:$0xff]
    %v313 = vld [vmem:[#allocation5 + $0x520] sm:$0xff]
    %v314 = vld [vmem:[#allocation5 + $0x528] sm:$0xff]
    %v315 = vld [vmem:[#allocation5 + $0x530] sm:$0xff]
    %v316 = vld [vmem:[#allocation5 + $0x538] sm:$0xff]
    %v317 = vld [vmem:[#allocation5 + $0x540] sm:$0xff]
    %v318 = vld [vmem:[#allocation5 + $0x548] sm:$0xff]
    %v319 = vld [vmem:[#allocation5 + $0x550] sm:$0xff]
    %v320 = vld [vmem:[#allocation5 + $0x558] sm:$0xff]
    %v321 = vld [vmem:[#allocation5 + $0x560] sm:$0xff]
    %v322 = vld [vmem:[#allocation5 + $0x568] sm:$0xff]
    %v323 = vld [vmem:[#allocation5 + $0x570] sm:$0xff]
    %v324 = vld [vmem:[#allocation5 + $0x578] sm:$0xff]
    %v325 = vld [vmem:[#allocation5 + $0x580] sm:$0xff]
    %v326 = vld [vmem:[#allocation5 + $0x588] sm:$0xff]
    %v327 = vld [vmem:[#allocation5 + $0x590] sm:$0xff]
    %v328 = vld [vmem:[#allocation5 + $0x598] sm:$0xff]
    %v329 = vld [vmem:[#allocation5 + $0x5a0] sm:$0xff]
    %v330 = vld [vmem:[#allocation5 + $0x5a8] sm:$0xff]
    %v331 = vld [vmem:[#allocation5 + $0x5b0] sm:$0xff]
    %v332 = vld [vmem:[#allocation5 + $0x5b8] sm:$0xff]
    %v333 = vld [vmem:[#allocation5 + $0x5c0] sm:$0xff]
    %v334 = vld [vmem:[#allocation5 + $0x5c8] sm:$0xff]
    %v335 = vld [vmem:[#allocation5 + $0x5d0] sm:$0xff]
    %v336 = vld [vmem:[#allocation5 + $0x5d8] sm:$0xff]
    %v337 = vld [vmem:[#allocation5 + $0x5e0] sm:$0xff]
    %v338 = vld [vmem:[#allocation5 + $0x5e8] sm:$0xff]
    %v339 = vld [vmem:[#allocation5 + $0x5f0] sm:$0xff]
    %v340 = vld [vmem:[#allocation5 + $0x5f8] sm:$0xff]
    %v341 = vld [vmem:[#allocation5 + $0x600] sm:$0xff]
    %v342 = vld [vmem:[#allocation5 + $0x608] sm:$0xff]
    %v343 = vld [vmem:[#allocation5 + $0x610] sm:$0xff]
    %v344 = vld [vmem:[#allocation5 + $0x618] sm:$0xff]
    %v345 = vld [vmem:[#allocation5 + $0x620] sm:$0xff]
    %v346 = vld [vmem:[#allocation5 + $0x628] sm:$0xff]
    %v347 = vld [vmem:[#allocation5 + $0x630] sm:$0xff]
    %v348 = vld [vmem:[#allocation5 + $0x638] sm:$0xff]
    %v349 = vld [vmem:[#allocation5 + $0x640] sm:$0xff]
    %v350 = vld [vmem:[#allocation5 + $0x648] sm:$0xff]
    %v351 = vld [vmem:[#allocation5 + $0x650] sm:$0xff]
    %v352 = vld [vmem:[#allocation5 + $0x658] sm:$0xff]
    %v353 = vld [vmem:[#allocation5 + $0x660] sm:$0xff]
    %v354 = vld [vmem:[#allocation5 + $0x668] sm:$0xff]
    %v355 = vld [vmem:[#allocation5 + $0x670] sm:$0xff]
    %v356 = vld [vmem:[#allocation5 + $0x678] sm:$0xff]
    %v357 = vld [vmem:[#allocation5 + $0x680] sm:$0xff]
    %v358 = vld [vmem:[#allocation5 + $0x688] sm:$0xff]
    %v359 = vld [vmem:[#allocation5 + $0x690] sm:$0xff]
    %v360 = vld [vmem:[#allocation5 + $0x698] sm:$0xff]
    %v361 = vld [vmem:[#allocation5 + $0x6a0] sm:$0xff]
    %v362 = vld [vmem:[#allocation5 + $0x6a8] sm:$0xff]
    %v363 = vld [vmem:[#allocation5 + $0x6b0] sm:$0xff]
    %v364 = vld [vmem:[#allocation5 + $0x6b8] sm:$0xff]
    %v365 = vld [vmem:[#allocation5 + $0x6c0] sm:$0xff]
    %v366 = vld [vmem:[#allocation5 + $0x6c8] sm:$0xff]
    %v367 = vld [vmem:[#allocation5 + $0x6d0] sm:$0xff]
    %v368 = vld [vmem:[#allocation5 + $0x6d8] sm:$0xff]
    %v369 = vld [vmem:[#allocation5 + $0x6e0] sm:$0xff]
    %v370 = vld [vmem:[#allocation5 + $0x6e8] sm:$0xff]
    %v371 = vld [vmem:[#allocation5 + $0x6f0] sm:$0xff]
    %v372 = vld [vmem:[#allocation5 + $0x6f8] sm:$0xff]
    %v373 = vld [vmem:[#allocation5 + $0x700] sm:$0xff]
    %v374 = vld [vmem:[#allocation5 + $0x708] sm:$0xff]
    %v375 = vld [vmem:[#allocation5 + $0x710] sm:$0xff]
    %v376 = vld [vmem:[#allocation5 + $0x718] sm:$0xff]
    %v377 = vld [vmem:[#allocation5 + $0x720] sm:$0xff]
    %v378 = vld [vmem:[#allocation5 + $0x728] sm:$0xff]
    %v379 = vld [vmem:[#allocation5 + $0x730] sm:$0xff]
    %v380 = vld [vmem:[#allocation5 + $0x738] sm:$0xff]
    %v381 = vld [vmem:[#allocation5 + $0x740] sm:$0xff]
    %v382 = vld [vmem:[#allocation5 + $0x748] sm:$0xff]
    %v383 = vld [vmem:[#allocation5 + $0x750] sm:$0xff]
    %v384 = vld [vmem:[#allocation5 + $0x758] sm:$0xff]
    %v385 = vld [vmem:[#allocation5 + $0x760] sm:$0xff]
    %v386 = vld [vmem:[#allocation5 + $0x768] sm:$0xff]
    %v387 = vld [vmem:[#allocation5 + $0x770] sm:$0xff]
    %v388 = vld [vmem:[#allocation5 + $0x778] sm:$0xff]
    %v389 = vld [vmem:[#allocation5 + $0x780] sm:$0xff]
    %v390 = vld [vmem:[#allocation5 + $0x788] sm:$0xff]
    %v391 = vld [vmem:[#allocation5 + $0x790] sm:$0xff]
    %v392 = vld [vmem:[#allocation5 + $0x798] sm:$0xff]
    %v393 = vld [vmem:[#allocation5 + $0x7a0] sm:$0xff]
    %v394 = vld [vmem:[#allocation5 + $0x7a8] sm:$0xff]
    %v395 = vld [vmem:[#allocation5 + $0x7b0] sm:$0xff]
    %v396 = vld [vmem:[#allocation5 + $0x7b8] sm:$0xff]
    %v397 = vld [vmem:[#allocation5 + $0x7c0] sm:$0xff]
    %v398 = vld [vmem:[#allocation5 + $0x7c8] sm:$0xff]
    %v399 = vld [vmem:[#allocation5 + $0x7d0] sm:$0xff]
    %v400 = vld [vmem:[#allocation5 + $0x7d8] sm:$0xff]
    %v401 = vld [vmem:[#allocation5 + $0x7e0] sm:$0xff]
    %v402 = vld [vmem:[#allocation5 + $0x7e8] sm:$0xff]
    %v403 = vld [vmem:[#allocation5 + $0x7f0] sm:$0xff]
    %v404 = vld [vmem:[#allocation5 + $0x7f8] sm:$0xff]
    %v405 = vld [vmem:[#allocation7] sm:$0xf]
    %v407 = vperm.slane %v405, 0
    %v408 = vperm.slane %v405, 1
    %v409 = vperm.slane %v405, 2
    %v410 = vperm.slane %v405, 3
    %v671 = vunpack.c.l.b16 %v149
    %v672 = vunpack.c.h.b16 %v149
    %v673 = vunpack.c.l.b16 %v150
    %v674 = vunpack.c.h.b16 %v150
    %v675 = vunpack.c.l.b16 %v151
    %v676 = vunpack.c.h.b16 %v151
    %v677 = vunpack.c.l.b16 %v152
    %v678 = vunpack.c.h.b16 %v152
    %v679 = vunpack.c.l.b16 %v153
    %v680 = vunpack.c.h.b16 %v153
    %v681 = vunpack.c.l.b16 %v154
    %v682 = vunpack.c.h.b16 %v154
    %v683 = vunpack.c.l.b16 %v155
    %v684 = vunpack.c.h.b16 %v155
    %v685 = vunpack.c.l.b16 %v156
    %v686 = vunpack.c.h.b16 %v156
    %v687 = vunpack.c.l.b16 %v157
    %v688 = vunpack.c.h.b16 %v157
    %v689 = vunpack.c.l.b16 %v158
    %v690 = vunpack.c.h.b16 %v158
    %v691 = vunpack.c.l.b16 %v159
    %v692 = vunpack.c.h.b16 %v159
    %v693 = vunpack.c.l.b16 %v160
    %v694 = vunpack.c.h.b16 %v160
    %v695 = vunpack.c.l.b16 %v161
    %v696 = vunpack.c.h.b16 %v161
    %v697 = vunpack.c.l.b16 %v162
    %v698 = vunpack.c.h.b16 %v162
    %v699 = vunpack.c.l.b16 %v163
    %v700 = vunpack.c.h.b16 %v163
    %v701 = vunpack.c.l.b16 %v164
    %v702 = vunpack.c.h.b16 %v164
    %v703 = vunpack.c.l.b16 %v165
    %v704 = vunpack.c.h.b16 %v165
    %v705 = vunpack.c.l.b16 %v166
    %v706 = vunpack.c.h.b16 %v166
    %v707 = vunpack.c.l.b16 %v167
    %v708 = vunpack.c.h.b16 %v167
    %v709 = vunpack.c.l.b16 %v168
    %v710 = vunpack.c.h.b16 %v168
    %v711 = vunpack.c.l.b16 %v169
    %v712 = vunpack.c.h.b16 %v169
    %v713 = vunpack.c.l.b16 %v170
    %v714 = vunpack.c.h.b16 %v170
    %v715 = vunpack.c.l.b16 %v171
    %v716 = vunpack.c.h.b16 %v171
    %v717 = vunpack.c.l.b16 %v172
    %v718 = vunpack.c.h.b16 %v172
    %v719 = vunpack.c.l.b16 %v173
    %v720 = vunpack.c.h.b16 %v173
    %v721 = vunpack.c.l.b16 %v174
    %v722 = vunpack.c.h.b16 %v174
    %v723 = vunpack.c.l.b16 %v175
    %v724 = vunpack.c.h.b16 %v175
    %v725 = vunpack.c.l.b16 %v176
    %v726 = vunpack.c.h.b16 %v176
    %v727 = vunpack.c.l.b16 %v177
    %v728 = vunpack.c.h.b16 %v177
    %v729 = vunpack.c.l.b16 %v178
    %v730 = vunpack.c.h.b16 %v178
    %v731 = vunpack.c.l.b16 %v179
    %v732 = vunpack.c.h.b16 %v179
    %v733 = vunpack.c.l.b16 %v180
    %v734 = vunpack.c.h.b16 %v180
    %v735 = vunpack.c.l.b16 %v181
    %v736 = vunpack.c.h.b16 %v181
    %v737 = vunpack.c.l.b16 %v182
    %v738 = vunpack.c.h.b16 %v182
    %v739 = vunpack.c.l.b16 %v183
    %v740 = vunpack.c.h.b16 %v183
    %v741 = vunpack.c.l.b16 %v184
    %v742 = vunpack.c.h.b16 %v184
    %v743 = vunpack.c.l.b16 %v185
    %v744 = vunpack.c.h.b16 %v185
    %v745 = vunpack.c.l.b16 %v186
    %v746 = vunpack.c.h.b16 %v186
    %v747 = vunpack.c.l.b16 %v187
    %v748 = vunpack.c.h.b16 %v187
    %v749 = vunpack.c.l.b16 %v188
    %v750 = vunpack.c.h.b16 %v188
    %v751 = vunpack.c.l.b16 %v189
    %v752 = vunpack.c.h.b16 %v189
    %v753 = vunpack.c.l.b16 %v190
    %v754 = vunpack.c.h.b16 %v190
    %v755 = vunpack.c.l.b16 %v191
    %v756 = vunpack.c.h.b16 %v191
    %v757 = vunpack.c.l.b16 %v192
    %v758 = vunpack.c.h.b16 %v192
    %v759 = vunpack.c.l.b16 %v193
    %v760 = vunpack.c.h.b16 %v193
    %v761 = vunpack.c.l.b16 %v194
    %v762 = vunpack.c.h.b16 %v194
    %v763 = vunpack.c.l.b16 %v195
    %v764 = vunpack.c.h.b16 %v195
    %v765 = vunpack.c.l.b16 %v196
    %v766 = vunpack.c.h.b16 %v196
    %v767 = vunpack.c.l.b16 %v197
    %v768 = vunpack.c.h.b16 %v197
    %v769 = vunpack.c.l.b16 %v198
    %v770 = vunpack.c.h.b16 %v198
    %v771 = vunpack.c.l.b16 %v199
    %v772 = vunpack.c.h.b16 %v199
    %v773 = vunpack.c.l.b16 %v200
    %v774 = vunpack.c.h.b16 %v200
    %v775 = vunpack.c.l.b16 %v201
    %v776 = vunpack.c.h.b16 %v201
    %v777 = vunpack.c.l.b16 %v202
    %v778 = vunpack.c.h.b16 %v202
    %v779 = vunpack.c.l.b16 %v203
    %v780 = vunpack.c.h.b16 %v203
    %v781 = vunpack.c.l.b16 %v204
    %v782 = vunpack.c.h.b16 %v204
    %v783 = vunpack.c.l.b16 %v205
    %v784 = vunpack.c.h.b16 %v205
    %v785 = vunpack.c.l.b16 %v206
    %v786 = vunpack.c.h.b16 %v206
    %v787 = vunpack.c.l.b16 %v207
    %v788 = vunpack.c.h.b16 %v207
    %v789 = vunpack.c.l.b16 %v208
    %v790 = vunpack.c.h.b16 %v208
    %v791 = vunpack.c.l.b16 %v209
    %v792 = vunpack.c.h.b16 %v209
    %v793 = vunpack.c.l.b16 %v210
    %v794 = vunpack.c.h.b16 %v210
    %v795 = vunpack.c.l.b16 %v211
    %v796 = vunpack.c.h.b16 %v211
    %v797 = vunpack.c.l.b16 %v212
    %v798 = vunpack.c.h.b16 %v212
    %v799 = vunpack.c.l.b16 %v213
    %v800 = vunpack.c.h.b16 %v213
    %v801 = vunpack.c.l.b16 %v214
    %v802 = vunpack.c.h.b16 %v214
    %v803 = vunpack.c.l.b16 %v215
    %v804 = vunpack.c.h.b16 %v215
    %v805 = vunpack.c.l.b16 %v216
    %v806 = vunpack.c.h.b16 %v216
    %v807 = vunpack.c.l.b16 %v217
    %v808 = vunpack.c.h.b16 %v217
    %v809 = vunpack.c.l.b16 %v218
    %v810 = vunpack.c.h.b16 %v218
    %v811 = vunpack.c.l.b16 %v219
    %v812 = vunpack.c.h.b16 %v219
    %v813 = vunpack.c.l.b16 %v220
    %v814 = vunpack.c.h.b16 %v220
    %v815 = vunpack.c.l.b16 %v221
    %v816 = vunpack.c.h.b16 %v221
    %v817 = vunpack.c.l.b16 %v222
    %v818 = vunpack.c.h.b16 %v222
    %v819 = vunpack.c.l.b16 %v223
    %v820 = vunpack.c.h.b16 %v223
    %v821 = vunpack.c.l.b16 %v224
    %v822 = vunpack.c.h.b16 %v224
    %v823 = vunpack.c.l.b16 %v225
    %v824 = vunpack.c.h.b16 %v225
    %v825 = vunpack.c.l.b16 %v226
    %v826 = vunpack.c.h.b16 %v226
    %v827 = vunpack.c.l.b16 %v227
    %v828 = vunpack.c.h.b16 %v227
    %v829 = vunpack.c.l.b16 %v228
    %v830 = vunpack.c.h.b16 %v228
    %v831 = vunpack.c.l.b16 %v229
    %v832 = vunpack.c.h.b16 %v229
    %v833 = vunpack.c.l.b16 %v230
    %v834 = vunpack.c.h.b16 %v230
    %v835 = vunpack.c.l.b16 %v231
    %v836 = vunpack.c.h.b16 %v231
    %v837 = vunpack.c.l.b16 %v232
    %v838 = vunpack.c.h.b16 %v232
    %v839 = vunpack.c.l.b16 %v233
    %v840 = vunpack.c.h.b16 %v233
    %v841 = vunpack.c.l.b16 %v234
    %v842 = vunpack.c.h.b16 %v234
    %v843 = vunpack.c.l.b16 %v235
    %v844 = vunpack.c.h.b16 %v235
    %v845 = vunpack.c.l.b16 %v236
    %v846 = vunpack.c.h.b16 %v236
    %v847 = vunpack.c.l.b16 %v237
    %v848 = vunpack.c.h.b16 %v237
    %v849 = vunpack.c.l.b16 %v238
    %v850 = vunpack.c.h.b16 %v238
    %v851 = vunpack.c.l.b16 %v239
    %v852 = vunpack.c.h.b16 %v239
    %v853 = vunpack.c.l.b16 %v240
    %v854 = vunpack.c.h.b16 %v240
    %v855 = vunpack.c.l.b16 %v241
    %v856 = vunpack.c.h.b16 %v241
    %v857 = vunpack.c.l.b16 %v242
    %v858 = vunpack.c.h.b16 %v242
    %v859 = vunpack.c.l.b16 %v243
    %v860 = vunpack.c.h.b16 %v243
    %v861 = vunpack.c.l.b16 %v244
    %v862 = vunpack.c.h.b16 %v244
    %v863 = vunpack.c.l.b16 %v245
    %v864 = vunpack.c.h.b16 %v245
    %v865 = vunpack.c.l.b16 %v246
    %v866 = vunpack.c.h.b16 %v246
    %v867 = vunpack.c.l.b16 %v247
    %v868 = vunpack.c.h.b16 %v247
    %v869 = vunpack.c.l.b16 %v248
    %v870 = vunpack.c.h.b16 %v248
    %v871 = vunpack.c.l.b16 %v249
    %v872 = vunpack.c.h.b16 %v249
    %v873 = vunpack.c.l.b16 %v250
    %v874 = vunpack.c.h.b16 %v250
    %v875 = vunpack.c.l.b16 %v251
    %v876 = vunpack.c.h.b16 %v251
    %v877 = vunpack.c.l.b16 %v252
    %v878 = vunpack.c.h.b16 %v252
    %v879 = vunpack.c.l.b16 %v253
    %v880 = vunpack.c.h.b16 %v253
    %v881 = vunpack.c.l.b16 %v254
    %v882 = vunpack.c.h.b16 %v254
    %v883 = vunpack.c.l.b16 %v255
    %v884 = vunpack.c.h.b16 %v255
    %v885 = vunpack.c.l.b16 %v256
    %v886 = vunpack.c.h.b16 %v256
    %v887 = vunpack.c.l.b16 %v257
    %v888 = vunpack.c.h.b16 %v257
    %v889 = vunpack.c.l.b16 %v258
    %v890 = vunpack.c.h.b16 %v258
    %v891 = vunpack.c.l.b16 %v259
    %v892 = vunpack.c.h.b16 %v259
    %v893 = vunpack.c.l.b16 %v260
    %v894 = vunpack.c.h.b16 %v260
    %v895 = vunpack.c.l.b16 %v261
    %v896 = vunpack.c.h.b16 %v261
    %v897 = vunpack.c.l.b16 %v262
    %v898 = vunpack.c.h.b16 %v262
    %v899 = vunpack.c.l.b16 %v263
    %v900 = vunpack.c.h.b16 %v263
    %v901 = vunpack.c.l.b16 %v264
    %v902 = vunpack.c.h.b16 %v264
    %v903 = vunpack.c.l.b16 %v265
    %v904 = vunpack.c.h.b16 %v265
    %v905 = vunpack.c.l.b16 %v266
    %v906 = vunpack.c.h.b16 %v266
    %v907 = vunpack.c.l.b16 %v267
    %v908 = vunpack.c.h.b16 %v267
    %v909 = vunpack.c.l.b16 %v268
    %v910 = vunpack.c.h.b16 %v268
    %v911 = vunpack.c.l.b16 %v269
    %v912 = vunpack.c.h.b16 %v269
    %v913 = vunpack.c.l.b16 %v270
    %v914 = vunpack.c.h.b16 %v270
    %v915 = vunpack.c.l.b16 %v271
    %v916 = vunpack.c.h.b16 %v271
    %v917 = vunpack.c.l.b16 %v272
    %v918 = vunpack.c.h.b16 %v272
    %v919 = vunpack.c.l.b16 %v273
    %v920 = vunpack.c.h.b16 %v273
    %v921 = vunpack.c.l.b16 %v274
    %v922 = vunpack.c.h.b16 %v274
    %v923 = vunpack.c.l.b16 %v275
    %v924 = vunpack.c.h.b16 %v275
    %v925 = vunpack.c.l.b16 %v276
    %v926 = vunpack.c.h.b16 %v276
    %v927 = vunpack.c.l.b16 %v277
    %v928 = vunpack.c.h.b16 %v277
    %v929 = vunpack.c.l.b16 %v278
    %v930 = vunpack.c.h.b16 %v278
    %v931 = vunpack.c.l.b16 %v279
    %v932 = vunpack.c.h.b16 %v279
    %v933 = vunpack.c.l.b16 %v280
    %v934 = vunpack.c.h.b16 %v280
    %v935 = vunpack.c.l.b16 %v281
    %v936 = vunpack.c.h.b16 %v281
    %v937 = vunpack.c.l.b16 %v282
    %v938 = vunpack.c.h.b16 %v282
    %v939 = vunpack.c.l.b16 %v283
    %v940 = vunpack.c.h.b16 %v283
    %v941 = vunpack.c.l.b16 %v284
    %v942 = vunpack.c.h.b16 %v284
    %v943 = vunpack.c.l.b16 %v285
    %v944 = vunpack.c.h.b16 %v285
    %v945 = vunpack.c.l.b16 %v286
    %v946 = vunpack.c.h.b16 %v286
    %v947 = vunpack.c.l.b16 %v287
    %v948 = vunpack.c.h.b16 %v287
    %v949 = vunpack.c.l.b16 %v288
    %v950 = vunpack.c.h.b16 %v288
    %v951 = vunpack.c.l.b16 %v289
    %v952 = vunpack.c.h.b16 %v289
    %v953 = vunpack.c.l.b16 %v290
    %v954 = vunpack.c.h.b16 %v290
    %v955 = vunpack.c.l.b16 %v291
    %v956 = vunpack.c.h.b16 %v291
    %v957 = vunpack.c.l.b16 %v292
    %v958 = vunpack.c.h.b16 %v292
    %v959 = vunpack.c.l.b16 %v293
    %v960 = vunpack.c.h.b16 %v293
    %v961 = vunpack.c.l.b16 %v294
    %v962 = vunpack.c.h.b16 %v294
    %v963 = vunpack.c.l.b16 %v295
    %v964 = vunpack.c.h.b16 %v295
    %v965 = vunpack.c.l.b16 %v296
    %v966 = vunpack.c.h.b16 %v296
    %v967 = vunpack.c.l.b16 %v297
    %v968 = vunpack.c.h.b16 %v297
    %v969 = vunpack.c.l.b16 %v298
    %v970 = vunpack.c.h.b16 %v298
    %v971 = vunpack.c.l.b16 %v299
    %v972 = vunpack.c.h.b16 %v299
    %v973 = vunpack.c.l.b16 %v300
    %v974 = vunpack.c.h.b16 %v300
    %v975 = vunpack.c.l.b16 %v301
    %v976 = vunpack.c.h.b16 %v301
    %v977 = vunpack.c.l.b16 %v302
    %v978 = vunpack.c.h.b16 %v302
    %v979 = vunpack.c.l.b16 %v303
    %v980 = vunpack.c.h.b16 %v303
    %v981 = vunpack.c.l.b16 %v304
    %v982 = vunpack.c.h.b16 %v304
    %v983 = vunpack.c.l.b16 %v305
    %v984 = vunpack.c.h.b16 %v305
    %v985 = vunpack.c.l.b16 %v306
    %v986 = vunpack.c.h.b16 %v306
    %v987 = vunpack.c.l.b16 %v307
    %v988 = vunpack.c.h.b16 %v307
    %v989 = vunpack.c.l.b16 %v308
    %v990 = vunpack.c.h.b16 %v308
    %v991 = vunpack.c.l.b16 %v309
    %v992 = vunpack.c.h.b16 %v309
    %v993 = vunpack.c.l.b16 %v310
    %v994 = vunpack.c.h.b16 %v310
    %v995 = vunpack.c.l.b16 %v311
    %v996 = vunpack.c.h.b16 %v311
    %v997 = vunpack.c.l.b16 %v312
    %v998 = vunpack.c.h.b16 %v312
    %v999 = vunpack.c.l.b16 %v313
    %v1000 = vunpack.c.h.b16 %v313
    %v1001 = vunpack.c.l.b16 %v314
    %v1002 = vunpack.c.h.b16 %v314
    %v1003 = vunpack.c.l.b16 %v315
    %v1004 = vunpack.c.h.b16 %v315
    %v1005 = vunpack.c.l.b16 %v316
    %v1006 = vunpack.c.h.b16 %v316
    %v1007 = vunpack.c.l.b16 %v317
    %v1008 = vunpack.c.h.b16 %v317
    %v1009 = vunpack.c.l.b16 %v318
    %v1010 = vunpack.c.h.b16 %v318
    %v1011 = vunpack.c.l.b16 %v319
    %v1012 = vunpack.c.h.b16 %v319
    %v1013 = vunpack.c.l.b16 %v320
    %v1014 = vunpack.c.h.b16 %v320
    %v1015 = vunpack.c.l.b16 %v321
    %v1016 = vunpack.c.h.b16 %v321
    %v1017 = vunpack.c.l.b16 %v322
    %v1018 = vunpack.c.h.b16 %v322
    %v1019 = vunpack.c.l.b16 %v323
    %v1020 = vunpack.c.h.b16 %v323
    %v1021 = vunpack.c.l.b16 %v324
    %v1022 = vunpack.c.h.b16 %v324
    %v1023 = vunpack.c.l.b16 %v325
    %v1024 = vunpack.c.h.b16 %v325
    %v1025 = vunpack.c.l.b16 %v326
    %v1026 = vunpack.c.h.b16 %v326
    %v1027 = vunpack.c.l.b16 %v327
    %v1028 = vunpack.c.h.b16 %v327
    %v1029 = vunpack.c.l.b16 %v328
    %v1030 = vunpack.c.h.b16 %v328
    %v1031 = vunpack.c.l.b16 %v329
    %v1032 = vunpack.c.h.b16 %v329
    %v1033 = vunpack.c.l.b16 %v330
    %v1034 = vunpack.c.h.b16 %v330
    %v1035 = vunpack.c.l.b16 %v331
    %v1036 = vunpack.c.h.b16 %v331
    %v1037 = vunpack.c.l.b16 %v332
    %v1038 = vunpack.c.h.b16 %v332
    %v1039 = vunpack.c.l.b16 %v333
    %v1040 = vunpack.c.h.b16 %v333
    %v1041 = vunpack.c.l.b16 %v334
    %v1042 = vunpack.c.h.b16 %v334
    %v1043 = vunpack.c.l.b16 %v335
    %v1044 = vunpack.c.h.b16 %v335
    %v1045 = vunpack.c.l.b16 %v336
    %v1046 = vunpack.c.h.b16 %v336
    %v1047 = vunpack.c.l.b16 %v337
    %v1048 = vunpack.c.h.b16 %v337
    %v1049 = vunpack.c.l.b16 %v338
    %v1050 = vunpack.c.h.b16 %v338
    %v1051 = vunpack.c.l.b16 %v339
    %v1052 = vunpack.c.h.b16 %v339
    %v1053 = vunpack.c.l.b16 %v340
    %v1054 = vunpack.c.h.b16 %v340
    %v1055 = vunpack.c.l.b16 %v341
    %v1056 = vunpack.c.h.b16 %v341
    %v1057 = vunpack.c.l.b16 %v342
    %v1058 = vunpack.c.h.b16 %v342
    %v1059 = vunpack.c.l.b16 %v343
    %v1060 = vunpack.c.h.b16 %v343
    %v1061 = vunpack.c.l.b16 %v344
    %v1062 = vunpack.c.h.b16 %v344
    %v1063 = vunpack.c.l.b16 %v345
    %v1064 = vunpack.c.h.b16 %v345
    %v1065 = vunpack.c.l.b16 %v346
    %v1066 = vunpack.c.h.b16 %v346
    %v1067 = vunpack.c.l.b16 %v347
    %v1068 = vunpack.c.h.b16 %v347
    %v1069 = vunpack.c.l.b16 %v348
    %v1070 = vunpack.c.h.b16 %v348
    %v1071 = vunpack.c.l.b16 %v349
    %v1072 = vunpack.c.h.b16 %v349
    %v1073 = vunpack.c.l.b16 %v350
    %v1074 = vunpack.c.h.b16 %v350
    %v1075 = vunpack.c.l.b16 %v351
    %v1076 = vunpack.c.h.b16 %v351
    %v1077 = vunpack.c.l.b16 %v352
    %v1078 = vunpack.c.h.b16 %v352
    %v1079 = vunpack.c.l.b16 %v353
    %v1080 = vunpack.c.h.b16 %v353
    %v1081 = vunpack.c.l.b16 %v354
    %v1082 = vunpack.c.h.b16 %v354
    %v1083 = vunpack.c.l.b16 %v355
    %v1084 = vunpack.c.h.b16 %v355
    %v1085 = vunpack.c.l.b16 %v356
    %v1086 = vunpack.c.h.b16 %v356
    %v1087 = vunpack.c.l.b16 %v357
    %v1088 = vunpack.c.h.b16 %v357
    %v1089 = vunpack.c.l.b16 %v358
    %v1090 = vunpack.c.h.b16 %v358
    %v1091 = vunpack.c.l.b16 %v359
    %v1092 = vunpack.c.h.b16 %v359
    %v1093 = vunpack.c.l.b16 %v360
    %v1094 = vunpack.c.h.b16 %v360
    %v1095 = vunpack.c.l.b16 %v361
    %v1096 = vunpack.c.h.b16 %v361
    %v1097 = vunpack.c.l.b16 %v362
    %v1098 = vunpack.c.h.b16 %v362
    %v1099 = vunpack.c.l.b16 %v363
    %v1100 = vunpack.c.h.b16 %v363
    %v1101 = vunpack.c.l.b16 %v364
    %v1102 = vunpack.c.h.b16 %v364
    %v1103 = vunpack.c.l.b16 %v365
    %v1104 = vunpack.c.h.b16 %v365
    %v1105 = vunpack.c.l.b16 %v366
    %v1106 = vunpack.c.h.b16 %v366
    %v1107 = vunpack.c.l.b16 %v367
    %v1108 = vunpack.c.h.b16 %v367
    %v1109 = vunpack.c.l.b16 %v368
    %v1110 = vunpack.c.h.b16 %v368
    %v1111 = vunpack.c.l.b16 %v369
    %v1112 = vunpack.c.h.b16 %v369
    %v1113 = vunpack.c.l.b16 %v370
    %v1114 = vunpack.c.h.b16 %v370
    %v1115 = vunpack.c.l.b16 %v371
    %v1116 = vunpack.c.h.b16 %v371
    %v1117 = vunpack.c.l.b16 %v372
    %v1118 = vunpack.c.h.b16 %v372
    %v1119 = vunpack.c.l.b16 %v373
    %v1120 = vunpack.c.h.b16 %v373
    %v1121 = vunpack.c.l.b16 %v374
    %v1122 = vunpack.c.h.b16 %v374
    %v1123 = vunpack.c.l.b16 %v375
    %v1124 = vunpack.c.h.b16 %v375
    %v1125 = vunpack.c.l.b16 %v376
    %v1126 = vunpack.c.h.b16 %v376
    %v1127 = vunpack.c.l.b16 %v377
    %v1128 = vunpack.c.h.b16 %v377
    %v1129 = vunpack.c.l.b16 %v378
    %v1130 = vunpack.c.h.b16 %v378
    %v1131 = vunpack.c.l.b16 %v379
    %v1132 = vunpack.c.h.b16 %v379
    %v1133 = vunpack.c.l.b16 %v380
    %v1134 = vunpack.c.h.b16 %v380
    %v1135 = vunpack.c.l.b16 %v381
    %v1136 = vunpack.c.h.b16 %v381
    %v1137 = vunpack.c.l.b16 %v382
    %v1138 = vunpack.c.h.b16 %v382
    %v1139 = vunpack.c.l.b16 %v383
    %v1140 = vunpack.c.h.b16 %v383
    %v1141 = vunpack.c.l.b16 %v384
    %v1142 = vunpack.c.h.b16 %v384
    %v1143 = vunpack.c.l.b16 %v385
    %v1144 = vunpack.c.h.b16 %v385
    %v1145 = vunpack.c.l.b16 %v386
    %v1146 = vunpack.c.h.b16 %v386
    %v1147 = vunpack.c.l.b16 %v387
    %v1148 = vunpack.c.h.b16 %v387
    %v1149 = vunpack.c.l.b16 %v388
    %v1150 = vunpack.c.h.b16 %v388
    %v1151 = vunpack.c.l.b16 %v389
    %v1152 = vunpack.c.h.b16 %v389
    %v1153 = vunpack.c.l.b16 %v390
    %v1154 = vunpack.c.h.b16 %v390
    %v1155 = vunpack.c.l.b16 %v391
    %v1156 = vunpack.c.h.b16 %v391
    %v1157 = vunpack.c.l.b16 %v392
    %v1158 = vunpack.c.h.b16 %v392
    %v1159 = vunpack.c.l.b16 %v393
    %v1160 = vunpack.c.h.b16 %v393
    %v1161 = vunpack.c.l.b16 %v394
    %v1162 = vunpack.c.h.b16 %v394
    %v1163 = vunpack.c.l.b16 %v395
    %v1164 = vunpack.c.h.b16 %v395
    %v1165 = vunpack.c.l.b16 %v396
    %v1166 = vunpack.c.h.b16 %v396
    %v1167 = vunpack.c.l.b16 %v397
    %v1168 = vunpack.c.h.b16 %v397
    %v1169 = vunpack.c.l.b16 %v398
    %v1170 = vunpack.c.h.b16 %v398
    %v1171 = vunpack.c.l.b16 %v399
    %v1172 = vunpack.c.h.b16 %v399
    %v1173 = vunpack.c.l.b16 %v400
    %v1174 = vunpack.c.h.b16 %v400
    %v1175 = vunpack.c.l.b16 %v401
    %v1176 = vunpack.c.h.b16 %v401
    %v1177 = vunpack.c.l.b16 %v402
    %v1178 = vunpack.c.h.b16 %v402
    %v1179 = vunpack.c.l.b16 %v403
    %v1180 = vunpack.c.h.b16 %v403
    %v1181 = vunpack.c.l.b16 %v404
    %v1182 = vunpack.c.h.b16 %v404
    %v1183 = vpack.c.b16 %v675, %v671
    %v1184 = vpack.c.b16 %v676, %v672
    %v1185 = vpack.c.b16 %v677, %v673
    %v1186 = vpack.c.b16 %v678, %v674
    %v1187 = vpack.c.b16 %v683, %v679
    %v1188 = vpack.c.b16 %v684, %v680
    %v1189 = vpack.c.b16 %v685, %v681
    %v1190 = vpack.c.b16 %v686, %v682
    %v1191 = vpack.c.b16 %v691, %v687
    %v1192 = vpack.c.b16 %v692, %v688
    %v1193 = vpack.c.b16 %v693, %v689
    %v1194 = vpack.c.b16 %v694, %v690
    %v1195 = vpack.c.b16 %v699, %v695
    %v1196 = vpack.c.b16 %v700, %v696
    %v1197 = vpack.c.b16 %v701, %v697
    %v1198 = vpack.c.b16 %v702, %v698
    %v1199 = vpack.c.b16 %v707, %v703
    %v1200 = vpack.c.b16 %v708, %v704
    %v1201 = vpack.c.b16 %v709, %v705
    %v1202 = vpack.c.b16 %v710, %v706
    %v1203 = vpack.c.b16 %v715, %v711
    %v1204 = vpack.c.b16 %v716, %v712
    %v1205 = vpack.c.b16 %v717, %v713
    %v1206 = vpack.c.b16 %v718, %v714
    %v1207 = vpack.c.b16 %v723, %v719
    %v1208 = vpack.c.b16 %v724, %v720
    %v1209 = vpack.c.b16 %v725, %v721
    %v1210 = vpack.c.b16 %v726, %v722
    %v1211 = vpack.c.b16 %v731, %v727
    %v1212 = vpack.c.b16 %v732, %v728
    %v1213 = vpack.c.b16 %v733, %v729
    %v1214 = vpack.c.b16 %v734, %v730
    %v1215 = vpack.c.b16 %v739, %v735
    %v1216 = vpack.c.b16 %v740, %v736
    %v1217 = vpack.c.b16 %v741, %v737
    %v1218 = vpack.c.b16 %v742, %v738
    %v1219 = vpack.c.b16 %v747, %v743
    %v1220 = vpack.c.b16 %v748, %v744
    %v1221 = vpack.c.b16 %v749, %v745
    %v1222 = vpack.c.b16 %v750, %v746
    %v1223 = vpack.c.b16 %v755, %v751
    %v1224 = vpack.c.b16 %v756, %v752
    %v1225 = vpack.c.b16 %v757, %v753
    %v1226 = vpack.c.b16 %v758, %v754
    %v1227 = vpack.c.b16 %v763, %v759
    %v1228 = vpack.c.b16 %v764, %v760
    %v1229 = vpack.c.b16 %v765, %v761
    %v1230 = vpack.c.b16 %v766, %v762
    %v1231 = vpack.c.b16 %v771, %v767
    %v1232 = vpack.c.b16 %v772, %v768
    %v1233 = vpack.c.b16 %v773, %v769
    %v1234 = vpack.c.b16 %v774, %v770
    %v1235 = vpack.c.b16 %v779, %v775
    %v1236 = vpack.c.b16 %v780, %v776
    %v1237 = vpack.c.b16 %v781, %v777
    %v1238 = vpack.c.b16 %v782, %v778
    %v1239 = vpack.c.b16 %v787, %v783
    %v1240 = vpack.c.b16 %v788, %v784
    %v1241 = vpack.c.b16 %v789, %v785
    %v1242 = vpack.c.b16 %v790, %v786
    %v1243 = vpack.c.b16 %v795, %v791
    %v1244 = vpack.c.b16 %v796, %v792
    %v1245 = vpack.c.b16 %v797, %v793
    %v1246 = vpack.c.b16 %v798, %v794
    %v1247 = vpack.c.b16 %v803, %v799
    %v1248 = vpack.c.b16 %v804, %v800
    %v1249 = vpack.c.b16 %v805, %v801
    %v1250 = vpack.c.b16 %v806, %v802
    %v1251 = vpack.c.b16 %v811, %v807
    %v1252 = vpack.c.b16 %v812, %v808
    %v1253 = vpack.c.b16 %v813, %v809
    %v1254 = vpack.c.b16 %v814, %v810
    %v1255 = vpack.c.b16 %v819, %v815
    %v1256 = vpack.c.b16 %v820, %v816
    %v1257 = vpack.c.b16 %v821, %v817
    %v1258 = vpack.c.b16 %v822, %v818
    %v1259 = vpack.c.b16 %v827, %v823
    %v1260 = vpack.c.b16 %v828, %v824
    %v1261 = vpack.c.b16 %v829, %v825
    %v1262 = vpack.c.b16 %v830, %v826
    %v1263 = vpack.c.b16 %v835, %v831
    %v1264 = vpack.c.b16 %v836, %v832
    %v1265 = vpack.c.b16 %v837, %v833
    %v1266 = vpack.c.b16 %v838, %v834
    %v1267 = vpack.c.b16 %v843, %v839
    %v1268 = vpack.c.b16 %v844, %v840
    %v1269 = vpack.c.b16 %v845, %v841
    %v1270 = vpack.c.b16 %v846, %v842
    %v1271 = vpack.c.b16 %v851, %v847
    %v1272 = vpack.c.b16 %v852, %v848
    %v1273 = vpack.c.b16 %v853, %v849
    %v1274 = vpack.c.b16 %v854, %v850
    %v1275 = vpack.c.b16 %v859, %v855
    %v1276 = vpack.c.b16 %v860, %v856
    %v1277 = vpack.c.b16 %v861, %v857
    %v1278 = vpack.c.b16 %v862, %v858
    %v1279 = vpack.c.b16 %v867, %v863
    %v1280 = vpack.c.b16 %v868, %v864
    %v1281 = vpack.c.b16 %v869, %v865
    %v1282 = vpack.c.b16 %v870, %v866
    %v1283 = vpack.c.b16 %v875, %v871
    %v1284 = vpack.c.b16 %v876, %v872
    %v1285 = vpack.c.b16 %v877, %v873
    %v1286 = vpack.c.b16 %v878, %v874
    %v1287 = vpack.c.b16 %v883, %v879
    %v1288 = vpack.c.b16 %v884, %v880
    %v1289 = vpack.c.b16 %v885, %v881
    %v1290 = vpack.c.b16 %v886, %v882
    %v1291 = vpack.c.b16 %v891, %v887
    %v1292 = vpack.c.b16 %v892, %v888
    %v1293 = vpack.c.b16 %v893, %v889
    %v1294 = vpack.c.b16 %v894, %v890
    %v1295 = vpack.c.b16 %v899, %v895
    %v1296 = vpack.c.b16 %v900, %v896
    %v1297 = vpack.c.b16 %v901, %v897
    %v1298 = vpack.c.b16 %v902, %v898
    %v1299 = vpack.c.b16 %v907, %v903
    %v1300 = vpack.c.b16 %v908, %v904
    %v1301 = vpack.c.b16 %v909, %v905
    %v1302 = vpack.c.b16 %v910, %v906
    %v1303 = vpack.c.b16 %v915, %v911
    %v1304 = vpack.c.b16 %v916, %v912
    %v1305 = vpack.c.b16 %v917, %v913
    %v1306 = vpack.c.b16 %v918, %v914
    %v1307 = vpack.c.b16 %v923, %v919
    %v1308 = vpack.c.b16 %v924, %v920
    %v1309 = vpack.c.b16 %v925, %v921
    %v1310 = vpack.c.b16 %v926, %v922
    %v1311 = vpack.c.b16 %v931, %v927
    %v1312 = vpack.c.b16 %v932, %v928
    %v1313 = vpack.c.b16 %v933, %v929
    %v1314 = vpack.c.b16 %v934, %v930
    %v1315 = vpack.c.b16 %v939, %v935
    %v1316 = vpack.c.b16 %v940, %v936
    %v1317 = vpack.c.b16 %v941, %v937
    %v1318 = vpack.c.b16 %v942, %v938
    %v1319 = vpack.c.b16 %v947, %v943
    %v1320 = vpack.c.b16 %v948, %v944
    %v1321 = vpack.c.b16 %v949, %v945
    %v1322 = vpack.c.b16 %v950, %v946
    %v1323 = vpack.c.b16 %v955, %v951
    %v1324 = vpack.c.b16 %v956, %v952
    %v1325 = vpack.c.b16 %v957, %v953
    %v1326 = vpack.c.b16 %v958, %v954
    %v1327 = vpack.c.b16 %v963, %v959
    %v1328 = vpack.c.b16 %v964, %v960
    %v1329 = vpack.c.b16 %v965, %v961
    %v1330 = vpack.c.b16 %v966, %v962
    %v1331 = vpack.c.b16 %v971, %v967
    %v1332 = vpack.c.b16 %v972, %v968
    %v1333 = vpack.c.b16 %v973, %v969
    %v1334 = vpack.c.b16 %v974, %v970
    %v1335 = vpack.c.b16 %v979, %v975
    %v1336 = vpack.c.b16 %v980, %v976
    %v1337 = vpack.c.b16 %v981, %v977
    %v1338 = vpack.c.b16 %v982, %v978
    %v1339 = vpack.c.b16 %v987, %v983
    %v1340 = vpack.c.b16 %v988, %v984
    %v1341 = vpack.c.b16 %v989, %v985
    %v1342 = vpack.c.b16 %v990, %v986
    %v1343 = vpack.c.b16 %v995, %v991
    %v1344 = vpack.c.b16 %v996, %v992
    %v1345 = vpack.c.b16 %v997, %v993
    %v1346 = vpack.c.b16 %v998, %v994
    %v1347 = vpack.c.b16 %v1003, %v999
    %v1348 = vpack.c.b16 %v1004, %v1000
    %v1349 = vpack.c.b16 %v1005, %v1001
    %v1350 = vpack.c.b16 %v1006, %v1002
    %v1351 = vpack.c.b16 %v1011, %v1007
    %v1352 = vpack.c.b16 %v1012, %v1008
    %v1353 = vpack.c.b16 %v1013, %v1009
    %v1354 = vpack.c.b16 %v1014, %v1010
    %v1355 = vpack.c.b16 %v1019, %v1015
    %v1356 = vpack.c.b16 %v1020, %v1016
    %v1357 = vpack.c.b16 %v1021, %v1017
    %v1358 = vpack.c.b16 %v1022, %v1018
    %v1359 = vpack.c.b16 %v1027, %v1023
    %v1360 = vpack.c.b16 %v1028, %v1024
    %v1361 = vpack.c.b16 %v1029, %v1025
    %v1362 = vpack.c.b16 %v1030, %v1026
    %v1363 = vpack.c.b16 %v1035, %v1031
    %v1364 = vpack.c.b16 %v1036, %v1032
    %v1365 = vpack.c.b16 %v1037, %v1033
    %v1366 = vpack.c.b16 %v1038, %v1034
    %v1367 = vpack.c.b16 %v1043, %v1039
    %v1368 = vpack.c.b16 %v1044, %v1040
    %v1369 = vpack.c.b16 %v1045, %v1041
    %v1370 = vpack.c.b16 %v1046, %v1042
    %v1371 = vpack.c.b16 %v1051, %v1047
    %v1372 = vpack.c.b16 %v1052, %v1048
    %v1373 = vpack.c.b16 %v1053, %v1049
    %v1374 = vpack.c.b16 %v1054, %v1050
    %v1375 = vpack.c.b16 %v1059, %v1055
    %v1376 = vpack.c.b16 %v1060, %v1056
    %v1377 = vpack.c.b16 %v1061, %v1057
    %v1378 = vpack.c.b16 %v1062, %v1058
    %v1379 = vpack.c.b16 %v1067, %v1063
    %v1380 = vpack.c.b16 %v1068, %v1064
    %v1381 = vpack.c.b16 %v1069, %v1065
    %v1382 = vpack.c.b16 %v1070, %v1066
    %v1383 = vpack.c.b16 %v1075, %v1071
    %v1384 = vpack.c.b16 %v1076, %v1072
    %v1385 = vpack.c.b16 %v1077, %v1073
    %v1386 = vpack.c.b16 %v1078, %v1074
    %v1387 = vpack.c.b16 %v1083, %v1079
    %v1388 = vpack.c.b16 %v1084, %v1080
    %v1389 = vpack.c.b16 %v1085, %v1081
    %v1390 = vpack.c.b16 %v1086, %v1082
    %v1391 = vpack.c.b16 %v1091, %v1087
    %v1392 = vpack.c.b16 %v1092, %v1088
    %v1393 = vpack.c.b16 %v1093, %v1089
    %v1394 = vpack.c.b16 %v1094, %v1090
    %v1395 = vpack.c.b16 %v1099, %v1095
    %v1396 = vpack.c.b16 %v1100, %v1096
    %v1397 = vpack.c.b16 %v1101, %v1097
    %v1398 = vpack.c.b16 %v1102, %v1098
    %v1399 = vpack.c.b16 %v1107, %v1103
    %v1400 = vpack.c.b16 %v1108, %v1104
    %v1401 = vpack.c.b16 %v1109, %v1105
    %v1402 = vpack.c.b16 %v1110, %v1106
    %v1403 = vpack.c.b16 %v1115, %v1111
    %v1404 = vpack.c.b16 %v1116, %v1112
    %v1405 = vpack.c.b16 %v1117, %v1113
    %v1406 = vpack.c.b16 %v1118, %v1114
    %v1407 = vpack.c.b16 %v1123, %v1119
    %v1408 = vpack.c.b16 %v1124, %v1120
    %v1409 = vpack.c.b16 %v1125, %v1121
    %v1410 = vpack.c.b16 %v1126, %v1122
    %v1411 = vpack.c.b16 %v1131, %v1127
    %v1412 = vpack.c.b16 %v1132, %v1128
    %v1413 = vpack.c.b16 %v1133, %v1129
    %v1414 = vpack.c.b16 %v1134, %v1130
    %v1415 = vpack.c.b16 %v1139, %v1135
    %v1416 = vpack.c.b16 %v1140, %v1136
    %v1417 = vpack.c.b16 %v1141, %v1137
    %v1418 = vpack.c.b16 %v1142, %v1138
    %v1419 = vpack.c.b16 %v1147, %v1143
    %v1420 = vpack.c.b16 %v1148, %v1144
    %v1421 = vpack.c.b16 %v1149, %v1145
    %v1422 = vpack.c.b16 %v1150, %v1146
    %v1423 = vpack.c.b16 %v1155, %v1151
    %v1424 = vpack.c.b16 %v1156, %v1152
    %v1425 = vpack.c.b16 %v1157, %v1153
    %v1426 = vpack.c.b16 %v1158, %v1154
    %v1427 = vpack.c.b16 %v1163, %v1159
    %v1428 = vpack.c.b16 %v1164, %v1160
    %v1429 = vpack.c.b16 %v1165, %v1161
    %v1430 = vpack.c.b16 %v1166, %v1162
    %v1431 = vpack.c.b16 %v1171, %v1167
    %v1432 = vpack.c.b16 %v1172, %v1168
    %v1433 = vpack.c.b16 %v1173, %v1169
    %v1434 = vpack.c.b16 %v1174, %v1170
    %v1435 = vpack.c.b16 %v1179, %v1175
    %v1436 = vpack.c.b16 %v1180, %v1176
    %v1437 = vpack.c.b16 %v1181, %v1177
    %v1438 = vpack.c.b16 %v1182, %v1178
    %1695 = vmatpush.bf16.msra.mxu0 %v1211
    %1696 = vmatpush.bf16.msra.mxu0 %v1207
    %1697 = vmatpush.bf16.msra.mxu0 %v1203
    %1698 = vmatpush.bf16.msra.mxu0 %v1199
    %1699 = vmatpush.bf16.msra.mxu0 %v1195
    %1700 = vmatpush.bf16.msra.mxu0 %v1191
    %1701 = vmatpush.bf16.msra.mxu0 %v1187
    %1702 = vmatpush.bf16.msra.mxu0 %v1183
    %1703 = vmatmul.bf16.gmra.mxu0 %v141
    %v1704 = vpop.f32.mrf.mxu0
    %v1705 = vadd.f32 %v407, %v1704
    %v1706 = vpop.f32.mrf.mxu0
    %v1707 = vadd.f32 %v407, %v1706
    %1708 = vdwg.mxu0
    %1709 = vmatpush.bf16.msra.mxu0 %v1243
    %1710 = vmatpush.bf16.msra.mxu0 %v1239
    %1711 = vmatpush.bf16.msra.mxu0 %v1235
    %1712 = vmatpush.bf16.msra.mxu0 %v1231
    %1713 = vmatpush.bf16.msra.mxu0 %v1227
    %1714 = vmatpush.bf16.msra.mxu0 %v1223
    %1715 = vmatpush.bf16.msra.mxu0 %v1219
    %1716 = vmatpush.bf16.msra.mxu0 %v1215
    %1717 = vmatmul.bf16.gmra.mxu0 %v142
    %v1718 = vpop.f32.mrf.mxu0
    %v1719 = vadd.f32 %v1705, %v1718
    %v1720 = vpop.f32.mrf.mxu0
    %v1721 = vadd.f32 %v1707, %v1720
    %1722 = vdwg.mxu0
    %1723 = vmatpush.bf16.msra.mxu0 %v1275
    %1724 = vmatpush.bf16.msra.mxu0 %v1271
    %1725 = vmatpush.bf16.msra.mxu0 %v1267
    %1726 = vmatpush.bf16.msra.mxu0 %v1263
    %1727 = vmatpush.bf16.msra.mxu0 %v1259
    %1728 = vmatpush.bf16.msra.mxu0 %v1255
    %1729 = vmatpush.bf16.msra.mxu0 %v1251
    %1730 = vmatpush.bf16.msra.mxu0 %v1247
    %1731 = vmatmul.bf16.gmra.mxu0 %v143
    %v1732 = vpop.f32.mrf.mxu0
    %v1733 = vadd.f32 %v1719, %v1732
    %v1734 = vpop.f32.mrf.mxu0
    %v1735 = vadd.f32 %v1721, %v1734
    %1736 = vdwg.mxu0
    %1737 = vmatpush.bf16.msra.mxu0 %v1307
    %1738 = vmatpush.bf16.msra.mxu0 %v1303
    %1739 = vmatpush.bf16.msra.mxu0 %v1299
    %1740 = vmatpush.bf16.msra.mxu0 %v1295
    %1741 = vmatpush.bf16.msra.mxu0 %v1291
    %1742 = vmatpush.bf16.msra.mxu0 %v1287
    %1743 = vmatpush.bf16.msra.mxu0 %v1283
    %1744 = vmatpush.bf16.msra.mxu0 %v1279
    %1745 = vmatmul.bf16.gmra.mxu0 %v144
    %v1746 = vpop.f32.mrf.mxu0
    %v1747 = vadd.f32 %v1733, %v1746
    %v1748 = vpop.f32.mrf.mxu0
    %v1749 = vadd.f32 %v1735, %v1748
    %1750 = vdwg.mxu0
    %1751 = vmatpush.bf16.msra.mxu0 %v1339
    %1752 = vmatpush.bf16.msra.mxu0 %v1335
    %1753 = vmatpush.bf16.msra.mxu0 %v1331
    %1754 = vmatpush.bf16.msra.mxu0 %v1327
    %1755 = vmatpush.bf16.msra.mxu0 %v1323
    %1756 = vmatpush.bf16.msra.mxu0 %v1319
    %1757 = vmatpush.bf16.msra.mxu0 %v1315
    %1758 = vmatpush.bf16.msra.mxu0 %v1311
    %1759 = vmatmul.bf16.gmra.mxu0 %v145
    %v1760 = vpop.f32.mrf.mxu0
    %v1761 = vadd.f32 %v1747, %v1760
    %v1762 = vpop.f32.mrf.mxu0
    %v1763 = vadd.f32 %v1749, %v1762
    %1764 = vdwg.mxu0
    %1765 = vmatpush.bf16.msra.mxu0 %v1371
    %1766 = vmatpush.bf16.msra.mxu0 %v1367
    %1767 = vmatpush.bf16.msra.mxu0 %v1363
    %1768 = vmatpush.bf16.msra.mxu0 %v1359
    %1769 = vmatpush.bf16.msra.mxu0 %v1355
    %1770 = vmatpush.bf16.msra.mxu0 %v1351
    %1771 = vmatpush.bf16.msra.mxu0 %v1347
    %1772 = vmatpush.bf16.msra.mxu0 %v1343
    %1773 = vmatmul.bf16.gmra.mxu0 %v146
    %v1774 = vpop.f32.mrf.mxu0
    %v1775 = vadd.f32 %v1761, %v1774
    %v1776 = vpop.f32.mrf.mxu0
    %v1777 = vadd.f32 %v1763, %v1776
    %1778 = vdwg.mxu0
    %1779 = vmatpush.bf16.msra.mxu0 %v1403
    %1780 = vmatpush.bf16.msra.mxu0 %v1399
    %1781 = vmatpush.bf16.msra.mxu0 %v1395
    %1782 = vmatpush.bf16.msra.mxu0 %v1391
    %1783 = vmatpush.bf16.msra.mxu0 %v1387
    %1784 = vmatpush.bf16.msra.mxu0 %v1383
    %1785 = vmatpush.bf16.msra.mxu0 %v1379
    %1786 = vmatpush.bf16.msra.mxu0 %v1375
    %1787 = vmatmul.bf16.gmra.mxu0 %v147
    %v1788 = vpop.f32.mrf.mxu0
    %v1789 = vadd.f32 %v1775, %v1788
    %v1790 = vpop.f32.mrf.mxu0
    %v1791 = vadd.f32 %v1777, %v1790
    %1792 = vdwg.mxu0
    %1793 = vmatpush.bf16.msra.mxu0 %v1435
    %1794 = vmatpush.bf16.msra.mxu0 %v1431
    %1795 = vmatpush.bf16.msra.mxu0 %v1427
    %1796 = vmatpush.bf16.msra.mxu0 %v1423
    %1797 = vmatpush.bf16.msra.mxu0 %v1419
    %1798 = vmatpush.bf16.msra.mxu0 %v1415
    %1799 = vmatpush.bf16.msra.mxu0 %v1411
    %1800 = vmatpush.bf16.msra.mxu0 %v1407
    %1801 = vmatmul.bf16.gmra.mxu0 %v148
    %v1802 = vpop.f32.mrf.mxu0
    %v1803 = vadd.f32 %v1789, %v1802
    %v1804 = vpop.f32.mrf.mxu0
    %v1805 = vadd.f32 %v1791, %v1804
    %1806 = vdwg.mxu0
    %1807 = vmatpush.bf16.msra.mxu0 %v1212
    %1808 = vmatpush.bf16.msra.mxu0 %v1208
    %1809 = vmatpush.bf16.msra.mxu0 %v1204
    %1810 = vmatpush.bf16.msra.mxu0 %v1200
    %1811 = vmatpush.bf16.msra.mxu0 %v1196
    %1812 = vmatpush.bf16.msra.mxu0 %v1192
    %1813 = vmatpush.bf16.msra.mxu0 %v1188
    %1814 = vmatpush.bf16.msra.mxu0 %v1184
    %1815 = vmatmul.bf16.gmra.mxu0 %v141
    %v1816 = vpop.f32.mrf.mxu0
    %v1817 = vadd.f32 %v408, %v1816
    %v1818 = vpop.f32.mrf.mxu0
    %v1819 = vadd.f32 %v408, %v1818
    %1820 = vdwg.mxu0
    %1821 = vmatpush.bf16.msra.mxu0 %v1244
    %1822 = vmatpush.bf16.msra.mxu0 %v1240
    %1823 = vmatpush.bf16.msra.mxu0 %v1236
    %1824 = vmatpush.bf16.msra.mxu0 %v1232
    %1825 = vmatpush.bf16.msra.mxu0 %v1228
    %1826 = vmatpush.bf16.msra.mxu0 %v1224
    %1827 = vmatpush.bf16.msra.mxu0 %v1220
    %1828 = vmatpush.bf16.msra.mxu0 %v1216
    %1829 = vmatmul.bf16.gmra.mxu0 %v142
    %v1830 = vpop.f32.mrf.mxu0
    %v1831 = vadd.f32 %v1817, %v1830
    %v1832 = vpop.f32.mrf.mxu0
    %v1833 = vadd.f32 %v1819, %v1832
    %1834 = vdwg.mxu0
    %1835 = vmatpush.bf16.msra.mxu0 %v1276
    %1836 = vmatpush.bf16.msra.mxu0 %v1272
    %1837 = vmatpush.bf16.msra.mxu0 %v1268
    %1838 = vmatpush.bf16.msra.mxu0 %v1264
    %1839 = vmatpush.bf16.msra.mxu0 %v1260
    %1840 = vmatpush.bf16.msra.mxu0 %v1256
    %1841 = vmatpush.bf16.msra.mxu0 %v1252
    %1842 = vmatpush.bf16.msra.mxu0 %v1248
    %1843 = vmatmul.bf16.gmra.mxu0 %v143
    %v1844 = vpop.f32.mrf.mxu0
    %v1845 = vadd.f32 %v1831, %v1844
    %v1846 = vpop.f32.mrf.mxu0
    %v1847 = vadd.f32 %v1833, %v1846
    %1848 = vdwg.mxu0
    %1849 = vmatpush.bf16.msra.mxu0 %v1308
    %1850 = vmatpush.bf16.msra.mxu0 %v1304
    %1851 = vmatpush.bf16.msra.mxu0 %v1300
    %1852 = vmatpush.bf16.msra.mxu0 %v1296
    %1853 = vmatpush.bf16.msra.mxu0 %v1292
    %1854 = vmatpush.bf16.msra.mxu0 %v1288
    %1855 = vmatpush.bf16.msra.mxu0 %v1284
    %1856 = vmatpush.bf16.msra.mxu0 %v1280
    %1857 = vmatmul.bf16.gmra.mxu0 %v144
    %v1858 = vpop.f32.mrf.mxu0
    %v1859 = vadd.f32 %v1845, %v1858
    %v1860 = vpop.f32.mrf.mxu0
    %v1861 = vadd.f32 %v1847, %v1860
    %1862 = vdwg.mxu0
    %1863 = vmatpush.bf16.msra.mxu0 %v1340
    %1864 = vmatpush.bf16.msra.mxu0 %v1336
    %1865 = vmatpush.bf16.msra.mxu0 %v1332
    %1866 = vmatpush.bf16.msra.mxu0 %v1328
    %1867 = vmatpush.bf16.msra.mxu0 %v1324
    %1868 = vmatpush.bf16.msra.mxu0 %v1320
    %1869 = vmatpush.bf16.msra.mxu0 %v1316
    %1870 = vmatpush.bf16.msra.mxu0 %v1312
    %1871 = vmatmul.bf16.gmra.mxu0 %v145
    %v1872 = vpop.f32.mrf.mxu0
    %v1873 = vadd.f32 %v1859, %v1872
    %v1874 = vpop.f32.mrf.mxu0
    %v1875 = vadd.f32 %v1861, %v1874
    %1876 = vdwg.mxu0
    %1877 = vmatpush.bf16.msra.mxu0 %v1372
    %1878 = vmatpush.bf16.msra.mxu0 %v1368
    %1879 = vmatpush.bf16.msra.mxu0 %v1364
    %1880 = vmatpush.bf16.msra.mxu0 %v1360
    %1881 = vmatpush.bf16.msra.mxu0 %v1356
    %1882 = vmatpush.bf16.msra.mxu0 %v1352
    %1883 = vmatpush.bf16.msra.mxu0 %v1348
    %1884 = vmatpush.bf16.msra.mxu0 %v1344
    %1885 = vmatmul.bf16.gmra.mxu0 %v146
    %v1886 = vpop.f32.mrf.mxu0
    %v1887 = vadd.f32 %v1873, %v1886
    %v1888 = vpop.f32.mrf.mxu0
    %v1889 = vadd.f32 %v1875, %v1888
    %1890 = vdwg.mxu0
    %1891 = vmatpush.bf16.msra.mxu0 %v1404
    %1892 = vmatpush.bf16.msra.mxu0 %v1400
    %1893 = vmatpush.bf16.msra.mxu0 %v1396
    %1894 = vmatpush.bf16.msra.mxu0 %v1392
    %1895 = vmatpush.bf16.msra.mxu0 %v1388
    %1896 = vmatpush.bf16.msra.mxu0 %v1384
    %1897 = vmatpush.bf16.msra.mxu0 %v1380
    %1898 = vmatpush.bf16.msra.mxu0 %v1376
    %1899 = vmatmul.bf16.gmra.mxu0 %v147
    %v1900 = vpop.f32.mrf.mxu0
    %v1901 = vadd.f32 %v1887, %v1900
    %v1902 = vpop.f32.mrf.mxu0
    %v1903 = vadd.f32 %v1889, %v1902
    %1904 = vdwg.mxu0
    %1905 = vmatpush.bf16.msra.mxu0 %v1436
    %1906 = vmatpush.bf16.msra.mxu0 %v1432
    %1907 = vmatpush.bf16.msra.mxu0 %v1428
    %1908 = vmatpush.bf16.msra.mxu0 %v1424
    %1909 = vmatpush.bf16.msra.mxu0 %v1420
    %1910 = vmatpush.bf16.msra.mxu0 %v1416
    %1911 = vmatpush.bf16.msra.mxu0 %v1412
    %1912 = vmatpush.bf16.msra.mxu0 %v1408
    %1913 = vmatmul.bf16.gmra.mxu0 %v148
    %v1914 = vpop.f32.mrf.mxu0
    %v1915 = vadd.f32 %v1901, %v1914
    %v1916 = vpop.f32.mrf.mxu0
    %v1917 = vadd.f32 %v1903, %v1916
    %1918 = vdwg.mxu0
    %1919 = vmatpush.bf16.msra.mxu0 %v1213
    %1920 = vmatpush.bf16.msra.mxu0 %v1209
    %1921 = vmatpush.bf16.msra.mxu0 %v1205
    %1922 = vmatpush.bf16.msra.mxu0 %v1201
    %1923 = vmatpush.bf16.msra.mxu0 %v1197
    %1924 = vmatpush.bf16.msra.mxu0 %v1193
    %1925 = vmatpush.bf16.msra.mxu0 %v1189
    %1926 = vmatpush.bf16.msra.mxu0 %v1185
    %1927 = vmatmul.bf16.gmra.mxu0 %v141
    %v1928 = vpop.f32.mrf.mxu0
    %v1929 = vadd.f32 %v409, %v1928
    %v1930 = vpop.f32.mrf.mxu0
    %v1931 = vadd.f32 %v409, %v1930
    %1932 = vdwg.mxu0
    %1933 = vmatpush.bf16.msra.mxu0 %v1245
    %1934 = vmatpush.bf16.msra.mxu0 %v1241
    %1935 = vmatpush.bf16.msra.mxu0 %v1237
    %1936 = vmatpush.bf16.msra.mxu0 %v1233
    %1937 = vmatpush.bf16.msra.mxu0 %v1229
    %1938 = vmatpush.bf16.msra.mxu0 %v1225
    %1939 = vmatpush.bf16.msra.mxu0 %v1221
    %1940 = vmatpush.bf16.msra.mxu0 %v1217
    %1941 = vmatmul.bf16.gmra.mxu0 %v142
    %v1942 = vpop.f32.mrf.mxu0
    %v1943 = vadd.f32 %v1929, %v1942
    %v1944 = vpop.f32.mrf.mxu0
    %v1945 = vadd.f32 %v1931, %v1944
    %1946 = vdwg.mxu0
    %1947 = vmatpush.bf16.msra.mxu0 %v1277
    %1948 = vmatpush.bf16.msra.mxu0 %v1273
    %1949 = vmatpush.bf16.msra.mxu0 %v1269
    %1950 = vmatpush.bf16.msra.mxu0 %v1265
    %1951 = vmatpush.bf16.msra.mxu0 %v1261
    %1952 = vmatpush.bf16.msra.mxu0 %v1257
    %1953 = vmatpush.bf16.msra.mxu0 %v1253
    %1954 = vmatpush.bf16.msra.mxu0 %v1249
    %1955 = vmatmul.bf16.gmra.mxu0 %v143
    %v1956 = vpop.f32.mrf.mxu0
    %v1957 = vadd.f32 %v1943, %v1956
    %v1958 = vpop.f32.mrf.mxu0
    %v1959 = vadd.f32 %v1945, %v1958
    %1960 = vdwg.mxu0
    %1961 = vmatpush.bf16.msra.mxu0 %v1309
    %1962 = vmatpush.bf16.msra.mxu0 %v1305
    %1963 = vmatpush.bf16.msra.mxu0 %v1301
    %1964 = vmatpush.bf16.msra.mxu0 %v1297
    %1965 = vmatpush.bf16.msra.mxu0 %v1293
    %1966 = vmatpush.bf16.msra.mxu0 %v1289
    %1967 = vmatpush.bf16.msra.mxu0 %v1285
    %1968 = vmatpush.bf16.msra.mxu0 %v1281
    %1969 = vmatmul.bf16.gmra.mxu0 %v144
    %v1970 = vpop.f32.mrf.mxu0
    %v1971 = vadd.f32 %v1957, %v1970
    %v1972 = vpop.f32.mrf.mxu0
    %v1973 = vadd.f32 %v1959, %v1972
    %1974 = vdwg.mxu0
    %1975 = vmatpush.bf16.msra.mxu0 %v1341
    %1976 = vmatpush.bf16.msra.mxu0 %v1337
    %1977 = vmatpush.bf16.msra.mxu0 %v1333
    %1978 = vmatpush.bf16.msra.mxu0 %v1329
    %1979 = vmatpush.bf16.msra.mxu0 %v1325
    %1980 = vmatpush.bf16.msra.mxu0 %v1321
    %1981 = vmatpush.bf16.msra.mxu0 %v1317
    %1982 = vmatpush.bf16.msra.mxu0 %v1313
    %1983 = vmatmul.bf16.gmra.mxu0 %v145
    %v1984 = vpop.f32.mrf.mxu0
    %v1985 = vadd.f32 %v1971, %v1984
    %v1986 = vpop.f32.mrf.mxu0
    %v1987 = vadd.f32 %v1973, %v1986
    %1988 = vdwg.mxu0
    %1989 = vmatpush.bf16.msra.mxu0 %v1373
    %1990 = vmatpush.bf16.msra.mxu0 %v1369
    %1991 = vmatpush.bf16.msra.mxu0 %v1365
    %1992 = vmatpush.bf16.msra.mxu0 %v1361
    %1993 = vmatpush.bf16.msra.mxu0 %v1357
    %1994 = vmatpush.bf16.msra.mxu0 %v1353
    %1995 = vmatpush.bf16.msra.mxu0 %v1349
    %1996 = vmatpush.bf16.msra.mxu0 %v1345
    %1997 = vmatmul.bf16.gmra.mxu0 %v146
    %v1998 = vpop.f32.mrf.mxu0
    %v1999 = vadd.f32 %v1985, %v1998
    %v2000 = vpop.f32.mrf.mxu0
    %v2001 = vadd.f32 %v1987, %v2000
    %2002 = vdwg.mxu0
    %2003 = vmatpush.bf16.msra.mxu0 %v1405
    %2004 = vmatpush.bf16.msra.mxu0 %v1401
    %2005 = vmatpush.bf16.msra.mxu0 %v1397
    %2006 = vmatpush.bf16.msra.mxu0 %v1393
    %2007 = vmatpush.bf16.msra.mxu0 %v1389
    %2008 = vmatpush.bf16.msra.mxu0 %v1385
    %2009 = vmatpush.bf16.msra.mxu0 %v1381
    %2010 = vmatpush.bf16.msra.mxu0 %v1377
    %2011 = vmatmul.bf16.gmra.mxu0 %v147
    %v2012 = vpop.f32.mrf.mxu0
    %v2013 = vadd.f32 %v1999, %v2012
    %v2014 = vpop.f32.mrf.mxu0
    %v2015 = vadd.f32 %v2001, %v2014
    %2016 = vdwg.mxu0
    %2017 = vmatpush.bf16.msra.mxu0 %v1437
    %2018 = vmatpush.bf16.msra.mxu0 %v1433
    %2019 = vmatpush.bf16.msra.mxu0 %v1429
    %2020 = vmatpush.bf16.msra.mxu0 %v1425
    %2021 = vmatpush.bf16.msra.mxu0 %v1421
    %2022 = vmatpush.bf16.msra.mxu0 %v1417
    %2023 = vmatpush.bf16.msra.mxu0 %v1413
    %2024 = vmatpush.bf16.msra.mxu0 %v1409
    %2025 = vmatmul.bf16.gmra.mxu0 %v148
    %v2026 = vpop.f32.mrf.mxu0
    %v2027 = vadd.f32 %v2013, %v2026
    %v2028 = vpop.f32.mrf.mxu0
    %v2029 = vadd.f32 %v2015, %v2028
    %2030 = vdwg.mxu0
    %2031 = vmatpush.bf16.msra.mxu0 %v1214
    %2032 = vmatpush.bf16.msra.mxu0 %v1210
    %2033 = vmatpush.bf16.msra.mxu0 %v1206
    %2034 = vmatpush.bf16.msra.mxu0 %v1202
    %2035 = vmatpush.bf16.msra.mxu0 %v1198
    %2036 = vmatpush.bf16.msra.mxu0 %v1194
    %2037 = vmatpush.bf16.msra.mxu0 %v1190
    %2038 = vmatpush.bf16.msra.mxu0 %v1186
    %2039 = vmatmul.bf16.gmra.mxu0 %v141
    %v2040 = vpop.f32.mrf.mxu0
    %v2041 = vadd.f32 %v410, %v2040
    %v2042 = vpop.f32.mrf.mxu0
    %v2043 = vadd.f32 %v410, %v2042
    %2044 = vdwg.mxu0
    %2045 = vmatpush.bf16.msra.mxu0 %v1246
    %2046 = vmatpush.bf16.msra.mxu0 %v1242
    %2047 = vmatpush.bf16.msra.mxu0 %v1238
    %2048 = vmatpush.bf16.msra.mxu0 %v1234
    %2049 = vmatpush.bf16.msra.mxu0 %v1230
    %2050 = vmatpush.bf16.msra.mxu0 %v1226
    %2051 = vmatpush.bf16.msra.mxu0 %v1222
    %2052 = vmatpush.bf16.msra.mxu0 %v1218
    %2053 = vmatmul.bf16.gmra.mxu0 %v142
    %v2054 = vpop.f32.mrf.mxu0
    %v2055 = vadd.f32 %v2041, %v2054
    %v2056 = vpop.f32.mrf.mxu0
    %v2057 = vadd.f32 %v2043, %v2056
    %2058 = vdwg.mxu0
    %2059 = vmatpush.bf16.msra.mxu0 %v1278
    %2060 = vmatpush.bf16.msra.mxu0 %v1274
    %2061 = vmatpush.bf16.msra.mxu0 %v1270
    %2062 = vmatpush.bf16.msra.mxu0 %v1266
    %2063 = vmatpush.bf16.msra.mxu0 %v1262
    %2064 = vmatpush.bf16.msra.mxu0 %v1258
    %2065 = vmatpush.bf16.msra.mxu0 %v1254
    %2066 = vmatpush.bf16.msra.mxu0 %v1250
    %2067 = vmatmul.bf16.gmra.mxu0 %v143
    %v2068 = vpop.f32.mrf.mxu0
    %v2069 = vadd.f32 %v2055, %v2068
    %v2070 = vpop.f32.mrf.mxu0
    %v2071 = vadd.f32 %v2057, %v2070
    %2072 = vdwg.mxu0
    %2073 = vmatpush.bf16.msra.mxu0 %v1310
    %2074 = vmatpush.bf16.msra.mxu0 %v1306
    %2075 = vmatpush.bf16.msra.mxu0 %v1302
    %2076 = vmatpush.bf16.msra.mxu0 %v1298
    %2077 = vmatpush.bf16.msra.mxu0 %v1294
    %2078 = vmatpush.bf16.msra.mxu0 %v1290
    %2079 = vmatpush.bf16.msra.mxu0 %v1286
    %2080 = vmatpush.bf16.msra.mxu0 %v1282
    %2081 = vmatmul.bf16.gmra.mxu0 %v144
    %v2082 = vpop.f32.mrf.mxu0
    %v2083 = vadd.f32 %v2069, %v2082
    %v2084 = vpop.f32.mrf.mxu0
    %v2085 = vadd.f32 %v2071, %v2084
    %2086 = vdwg.mxu0
    %2087 = vmatpush.bf16.msra.mxu0 %v1342
    %2088 = vmatpush.bf16.msra.mxu0 %v1338
    %2089 = vmatpush.bf16.msra.mxu0 %v1334
    %2090 = vmatpush.bf16.msra.mxu0 %v1330
    %2091 = vmatpush.bf16.msra.mxu0 %v1326
    %2092 = vmatpush.bf16.msra.mxu0 %v1322
    %2093 = vmatpush.bf16.msra.mxu0 %v1318
    %2094 = vmatpush.bf16.msra.mxu0 %v1314
    %2095 = vmatmul.bf16.gmra.mxu0 %v145
    %v2096 = vpop.f32.mrf.mxu0
    %v2097 = vadd.f32 %v2083, %v2096
    %v2098 = vpop.f32.mrf.mxu0
    %v2099 = vadd.f32 %v2085, %v2098
    %2100 = vdwg.mxu0
    %2101 = vmatpush.bf16.msra.mxu0 %v1374
    %2102 = vmatpush.bf16.msra.mxu0 %v1370
    %2103 = vmatpush.bf16.msra.mxu0 %v1366
    %2104 = vmatpush.bf16.msra.mxu0 %v1362
    %2105 = vmatpush.bf16.msra.mxu0 %v1358
    %2106 = vmatpush.bf16.msra.mxu0 %v1354
    %2107 = vmatpush.bf16.msra.mxu0 %v1350
    %2108 = vmatpush.bf16.msra.mxu0 %v1346
    %2109 = vmatmul.bf16.gmra.mxu0 %v146
    %v2110 = vpop.f32.mrf.mxu0
    %v2111 = vadd.f32 %v2097, %v2110
    %v2112 = vpop.f32.mrf.mxu0
    %v2113 = vadd.f32 %v2099, %v2112
    %2114 = vdwg.mxu0
    %2115 = vmatpush.bf16.msra.mxu0 %v1406
    %2116 = vmatpush.bf16.msra.mxu0 %v1402
    %2117 = vmatpush.bf16.msra.mxu0 %v1398
    %2118 = vmatpush.bf16.msra.mxu0 %v1394
    %2119 = vmatpush.bf16.msra.mxu0 %v1390
    %2120 = vmatpush.bf16.msra.mxu0 %v1386
    %2121 = vmatpush.bf16.msra.mxu0 %v1382
    %2122 = vmatpush.bf16.msra.mxu0 %v1378
    %2123 = vmatmul.bf16.gmra.mxu0 %v147
    %v2124 = vpop.f32.mrf.mxu0
    %v2125 = vadd.f32 %v2111, %v2124
    %v2126 = vpop.f32.mrf.mxu0
    %v2127 = vadd.f32 %v2113, %v2126
    %2128 = vdwg.mxu0
    %2129 = vmatpush.bf16.msra.mxu0 %v1438
    %2130 = vmatpush.bf16.msra.mxu0 %v1434
    %2131 = vmatpush.bf16.msra.mxu0 %v1430
    %2132 = vmatpush.bf16.msra.mxu0 %v1426
    %2133 = vmatpush.bf16.msra.mxu0 %v1422
    %2134 = vmatpush.bf16.msra.mxu0 %v1418
    %2135 = vmatpush.bf16.msra.mxu0 %v1414
    %2136 = vmatpush.bf16.msra.mxu0 %v1410
    %2137 = vmatmul.bf16.gmra.mxu0 %v148
    %v2138 = vpop.f32.mrf.mxu0
    %v2139 = vadd.f32 %v2125, %v2138
    %v2140 = vpop.f32.mrf.mxu0
    %v2141 = vadd.f32 %v2127, %v2140
    %2142 = vdwg.mxu0
    %v2143 = vsub.f32 0.0, %v1803
    %v2144 = vsub.f32 0.0, %v1915
    %v2145 = vsub.f32 0.0, %v2027
    %v2146 = vsub.f32 0.0, %v2139
    %v2147 = vsub.f32 0.0, %v1805
    %v2148 = vsub.f32 0.0, %v1917
    %v2149 = vsub.f32 0.0, %v2029
    %v2150 = vsub.f32 0.0, %v2141
    %v2151 = vmul.f32 %v2143, 1.442695
    %v2152 = vpow.pop %v2151
    %v2153 = vmul.f32 %v2144, 1.442695
    %v2154 = vpow.pop %v2153
    %v2155 = vmul.f32 %v2145, 1.442695
    %v2156 = vpow.pop %v2155
    %v2157 = vmul.f32 %v2146, 1.442695
    %v2158 = vpow.pop %v2157
    %v2159 = vmul.f32 %v2147, 1.442695
    %v2160 = vpow.pop %v2159
    %v2161 = vmul.f32 %v2148, 1.442695
    %v2162 = vpow.pop %v2161
    %v2163 = vmul.f32 %v2149, 1.442695
    %v2164 = vpow.pop %v2163
    %v2165 = vmul.f32 %v2150, 1.442695
    %v2166 = vpow.pop %v2165
    %v2167 = vadd.f32 %v2152, 1.0
    %v2168 = vadd.f32 %v2154, 1.0
    %v2169 = vadd.f32 %v2156, 1.0
    %v2170 = vadd.f32 %v2158, 1.0
    %v2171 = vadd.f32 %v2160, 1.0
    %v2172 = vadd.f32 %v2162, 1.0
    %v2173 = vadd.f32 %v2164, 1.0
    %v2174 = vadd.f32 %v2166, 1.0
    %v2175 = vrcp.pop %v2167
    %v2176 = vrcp.pop %v2168
    %v2177 = vrcp.pop %v2169
    %v2178 = vrcp.pop %v2170
    %v2179 = vrcp.pop %v2171
    %v2180 = vrcp.pop %v2172
    %v2181 = vrcp.pop %v2173
    %v2182 = vrcp.pop %v2174
    %v2183 = vpack.c.bf16 %v2179, %v2175
    %v2184 = vpack.c.bf16 %v2180, %v2176
    %v2185 = vpack.c.bf16 %v2181, %v2177
    %v2186 = vpack.c.bf16 %v2182, %v2178
    %v2187 = vld [vmem:[#allocation8] sm:$0xff]
    %v2188 = vld [vmem:[#allocation8 + $0x8] sm:$0xff]
    %v2189 = vld [vmem:[#allocation8 + $0x10] sm:$0xff]
    %v2190 = vld [vmem:[#allocation8 + $0x18] sm:$0xff]
    %v2191 = vld [vmem:[#allocation8 + $0x20] sm:$0xff]
    %v2192 = vld [vmem:[#allocation8 + $0x28] sm:$0xff]
    %v2193 = vld [vmem:[#allocation8 + $0x30] sm:$0xff]
    %v2194 = vld [vmem:[#allocation8 + $0x38] sm:$0xff]
    %v2195 = vld [vmem:[#allocation8 + $0x40] sm:$0xff]
    %v2196 = vld [vmem:[#allocation8 + $0x48] sm:$0xff]
    %v2197 = vld [vmem:[#allocation8 + $0x50] sm:$0xff]
    %v2198 = vld [vmem:[#allocation8 + $0x58] sm:$0xff]
    %v2199 = vld [vmem:[#allocation8 + $0x60] sm:$0xff]
    %v2200 = vld [vmem:[#allocation8 + $0x68] sm:$0xff]
    %v2201 = vld [vmem:[#allocation8 + $0x70] sm:$0xff]
    %v2202 = vld [vmem:[#allocation8 + $0x78] sm:$0xff]
    %v2203 = vld [vmem:[#allocation8 + $0x80] sm:$0xff]
    %v2204 = vld [vmem:[#allocation8 + $0x88] sm:$0xff]
    %v2205 = vld [vmem:[#allocation8 + $0x90] sm:$0xff]
    %v2206 = vld [vmem:[#allocation8 + $0x98] sm:$0xff]
    %v2207 = vld [vmem:[#allocation8 + $0xa0] sm:$0xff]
    %v2208 = vld [vmem:[#allocation8 + $0xa8] sm:$0xff]
    %v2209 = vld [vmem:[#allocation8 + $0xb0] sm:$0xff]
    %v2210 = vld [vmem:[#allocation8 + $0xb8] sm:$0xff]
    %v2211 = vld [vmem:[#allocation8 + $0xc0] sm:$0xff]
    %v2212 = vld [vmem:[#allocation8 + $0xc8] sm:$0xff]
    %v2213 = vld [vmem:[#allocation8 + $0xd0] sm:$0xff]
    %v2214 = vld [vmem:[#allocation8 + $0xd8] sm:$0xff]
    %v2215 = vld [vmem:[#allocation8 + $0xe0] sm:$0xff]
    %v2216 = vld [vmem:[#allocation8 + $0xe8] sm:$0xff]
    %v2217 = vld [vmem:[#allocation8 + $0xf0] sm:$0xff]
    %v2218 = vld [vmem:[#allocation8 + $0xf8] sm:$0xff]
    %v2219 = vld [vmem:[#allocation8 + $0x100] sm:$0xff]
    %v2220 = vld [vmem:[#allocation8 + $0x108] sm:$0xff]
    %v2221 = vld [vmem:[#allocation8 + $0x110] sm:$0xff]
    %v2222 = vld [vmem:[#allocation8 + $0x118] sm:$0xff]
    %v2223 = vld [vmem:[#allocation8 + $0x120] sm:$0xff]
    %v2224 = vld [vmem:[#allocation8 + $0x128] sm:$0xff]
    %v2225 = vld [vmem:[#allocation8 + $0x130] sm:$0xff]
    %v2226 = vld [vmem:[#allocation8 + $0x138] sm:$0xff]
    %v2227 = vld [vmem:[#allocation8 + $0x140] sm:$0xff]
    %v2228 = vld [vmem:[#allocation8 + $0x148] sm:$0xff]
    %v2229 = vld [vmem:[#allocation8 + $0x150] sm:$0xff]
    %v2230 = vld [vmem:[#allocation8 + $0x158] sm:$0xff]
    %v2231 = vld [vmem:[#allocation8 + $0x160] sm:$0xff]
    %v2232 = vld [vmem:[#allocation8 + $0x168] sm:$0xff]
    %v2233 = vld [vmem:[#allocation8 + $0x170] sm:$0xff]
    %v2234 = vld [vmem:[#allocation8 + $0x178] sm:$0xff]
    %v2235 = vld [vmem:[#allocation8 + $0x180] sm:$0xff]
    %v2236 = vld [vmem:[#allocation8 + $0x188] sm:$0xff]
    %v2237 = vld [vmem:[#allocation8 + $0x190] sm:$0xff]
    %v2238 = vld [vmem:[#allocation8 + $0x198] sm:$0xff]
    %v2239 = vld [vmem:[#allocation8 + $0x1a0] sm:$0xff]
    %v2240 = vld [vmem:[#allocation8 + $0x1a8] sm:$0xff]
    %v2241 = vld [vmem:[#allocation8 + $0x1b0] sm:$0xff]
    %v2242 = vld [vmem:[#allocation8 + $0x1b8] sm:$0xff]
    %v2243 = vld [vmem:[#allocation8 + $0x1c0] sm:$0xff]
    %v2244 = vld [vmem:[#allocation8 + $0x1c8] sm:$0xff]
    %v2245 = vld [vmem:[#allocation8 + $0x1d0] sm:$0xff]
    %v2246 = vld [vmem:[#allocation8 + $0x1d8] sm:$0xff]
    %v2247 = vld [vmem:[#allocation8 + $0x1e0] sm:$0xff]
    %v2248 = vld [vmem:[#allocation8 + $0x1e8] sm:$0xff]
    %v2249 = vld [vmem:[#allocation8 + $0x1f0] sm:$0xff]
    %v2250 = vld [vmem:[#allocation8 + $0x1f8] sm:$0xff]
    %v2251 = vld [vmem:[%s4] sm:$0x3]
    %v2253 = vperm.slane %v2251, 0
    %v2254 = vperm.slane %v2251, 1
    %v2321 = vunpack.c.l.b16 %v2187
    %v2322 = vunpack.c.h.b16 %v2187
    %v2323 = vunpack.c.l.b16 %v2188
    %v2324 = vunpack.c.h.b16 %v2188
    %v2325 = vunpack.c.l.b16 %v2189
    %v2326 = vunpack.c.h.b16 %v2189
    %v2327 = vunpack.c.l.b16 %v2190
    %v2328 = vunpack.c.h.b16 %v2190
    %v2329 = vunpack.c.l.b16 %v2191
    %v2330 = vunpack.c.h.b16 %v2191
    %v2331 = vunpack.c.l.b16 %v2192
    %v2332 = vunpack.c.h.b16 %v2192
    %v2333 = vunpack.c.l.b16 %v2193
    %v2334 = vunpack.c.h.b16 %v2193
    %v2335 = vunpack.c.l.b16 %v2194
    %v2336 = vunpack.c.h.b16 %v2194
    %v2337 = vunpack.c.l.b16 %v2195
    %v2338 = vunpack.c.h.b16 %v2195
    %v2339 = vunpack.c.l.b16 %v2196
    %v2340 = vunpack.c.h.b16 %v2196
    %v2341 = vunpack.c.l.b16 %v2197
    %v2342 = vunpack.c.h.b16 %v2197
    %v2343 = vunpack.c.l.b16 %v2198
    %v2344 = vunpack.c.h.b16 %v2198
    %v2345 = vunpack.c.l.b16 %v2199
    %v2346 = vunpack.c.h.b16 %v2199
    %v2347 = vunpack.c.l.b16 %v2200
    %v2348 = vunpack.c.h.b16 %v2200
    %v2349 = vunpack.c.l.b16 %v2201
    %v2350 = vunpack.c.h.b16 %v2201
    %v2351 = vunpack.c.l.b16 %v2202
    %v2352 = vunpack.c.h.b16 %v2202
    %v2353 = vunpack.c.l.b16 %v2203
    %v2354 = vunpack.c.h.b16 %v2203
    %v2355 = vunpack.c.l.b16 %v2204
    %v2356 = vunpack.c.h.b16 %v2204
    %v2357 = vunpack.c.l.b16 %v2205
    %v2358 = vunpack.c.h.b16 %v2205
    %v2359 = vunpack.c.l.b16 %v2206
    %v2360 = vunpack.c.h.b16 %v2206
    %v2361 = vunpack.c.l.b16 %v2207
    %v2362 = vunpack.c.h.b16 %v2207
    %v2363 = vunpack.c.l.b16 %v2208
    %v2364 = vunpack.c.h.b16 %v2208
    %v2365 = vunpack.c.l.b16 %v2209
    %v2366 = vunpack.c.h.b16 %v2209
    %v2367 = vunpack.c.l.b16 %v2210
    %v2368 = vunpack.c.h.b16 %v2210
    %v2369 = vunpack.c.l.b16 %v2211
    %v2370 = vunpack.c.h.b16 %v2211
    %v2371 = vunpack.c.l.b16 %v2212
    %v2372 = vunpack.c.h.b16 %v2212
    %v2373 = vunpack.c.l.b16 %v2213
    %v2374 = vunpack.c.h.b16 %v2213
    %v2375 = vunpack.c.l.b16 %v2214
    %v2376 = vunpack.c.h.b16 %v2214
    %v2377 = vunpack.c.l.b16 %v2215
    %v2378 = vunpack.c.h.b16 %v2215
    %v2379 = vunpack.c.l.b16 %v2216
    %v2380 = vunpack.c.h.b16 %v2216
    %v2381 = vunpack.c.l.b16 %v2217
    %v2382 = vunpack.c.h.b16 %v2217
    %v2383 = vunpack.c.l.b16 %v2218
    %v2384 = vunpack.c.h.b16 %v2218
    %v2385 = vunpack.c.l.b16 %v2219
    %v2386 = vunpack.c.h.b16 %v2219
    %v2387 = vunpack.c.l.b16 %v2220
    %v2388 = vunpack.c.h.b16 %v2220
    %v2389 = vunpack.c.l.b16 %v2221
    %v2390 = vunpack.c.h.b16 %v2221
    %v2391 = vunpack.c.l.b16 %v2222
    %v2392 = vunpack.c.h.b16 %v2222
    %v2393 = vunpack.c.l.b16 %v2223
    %v2394 = vunpack.c.h.b16 %v2223
    %v2395 = vunpack.c.l.b16 %v2224
    %v2396 = vunpack.c.h.b16 %v2224
    %v2397 = vunpack.c.l.b16 %v2225
    %v2398 = vunpack.c.h.b16 %v2225
    %v2399 = vunpack.c.l.b16 %v2226
    %v2400 = vunpack.c.h.b16 %v2226
    %v2401 = vunpack.c.l.b16 %v2227
    %v2402 = vunpack.c.h.b16 %v2227
    %v2403 = vunpack.c.l.b16 %v2228
    %v2404 = vunpack.c.h.b16 %v2228
    %v2405 = vunpack.c.l.b16 %v2229
    %v2406 = vunpack.c.h.b16 %v2229
    %v2407 = vunpack.c.l.b16 %v2230
    %v2408 = vunpack.c.h.b16 %v2230
    %v2409 = vunpack.c.l.b16 %v2231
    %v2410 = vunpack.c.h.b16 %v2231
    %v2411 = vunpack.c.l.b16 %v2232
    %v2412 = vunpack.c.h.b16 %v2232
    %v2413 = vunpack.c.l.b16 %v2233
    %v2414 = vunpack.c.h.b16 %v2233
    %v2415 = vunpack.c.l.b16 %v2234
    %v2416 = vunpack.c.h.b16 %v2234
    %v2417 = vunpack.c.l.b16 %v2235
    %v2418 = vunpack.c.h.b16 %v2235
    %v2419 = vunpack.c.l.b16 %v2236
    %v2420 = vunpack.c.h.b16 %v2236
    %v2421 = vunpack.c.l.b16 %v2237
    %v2422 = vunpack.c.h.b16 %v2237
    %v2423 = vunpack.c.l.b16 %v2238
    %v2424 = vunpack.c.h.b16 %v2238
    %v2425 = vunpack.c.l.b16 %v2239
    %v2426 = vunpack.c.h.b16 %v2239
    %v2427 = vunpack.c.l.b16 %v2240
    %v2428 = vunpack.c.h.b16 %v2240
    %v2429 = vunpack.c.l.b16 %v2241
    %v2430 = vunpack.c.h.b16 %v2241
    %v2431 = vunpack.c.l.b16 %v2242
    %v2432 = vunpack.c.h.b16 %v2242
    %v2433 = vunpack.c.l.b16 %v2243
    %v2434 = vunpack.c.h.b16 %v2243
    %v2435 = vunpack.c.l.b16 %v2244
    %v2436 = vunpack.c.h.b16 %v2244
    %v2437 = vunpack.c.l.b16 %v2245
    %v2438 = vunpack.c.h.b16 %v2245
    %v2439 = vunpack.c.l.b16 %v2246
    %v2440 = vunpack.c.h.b16 %v2246
    %v2441 = vunpack.c.l.b16 %v2247
    %v2442 = vunpack.c.h.b16 %v2247
    %v2443 = vunpack.c.l.b16 %v2248
    %v2444 = vunpack.c.h.b16 %v2248
    %v2445 = vunpack.c.l.b16 %v2249
    %v2446 = vunpack.c.h.b16 %v2249
    %v2447 = vunpack.c.l.b16 %v2250
    %v2448 = vunpack.c.h.b16 %v2250
    %v2449 = vpack.c.b16 %v2323, %v2321
    %v2450 = vpack.c.b16 %v2324, %v2322
    %v2451 = vpack.c.b16 %v2327, %v2325
    %v2452 = vpack.c.b16 %v2328, %v2326
    %v2453 = vpack.c.b16 %v2331, %v2329
    %v2454 = vpack.c.b16 %v2332, %v2330
    %v2455 = vpack.c.b16 %v2335, %v2333
    %v2456 = vpack.c.b16 %v2336, %v2334
    %v2457 = vpack.c.b16 %v2339, %v2337
    %v2458 = vpack.c.b16 %v2340, %v2338
    %v2459 = vpack.c.b16 %v2343, %v2341
    %v2460 = vpack.c.b16 %v2344, %v2342
    %v2461 = vpack.c.b16 %v2347, %v2345
    %v2462 = vpack.c.b16 %v2348, %v2346
    %v2463 = vpack.c.b16 %v2351, %v2349
    %v2464 = vpack.c.b16 %v2352, %v2350
    %v2465 = vpack.c.b16 %v2355, %v2353
    %v2466 = vpack.c.b16 %v2356, %v2354
    %v2467 = vpack.c.b16 %v2359, %v2357
    %v2468 = vpack.c.b16 %v2360, %v2358
    %v2469 = vpack.c.b16 %v2363, %v2361
    %v2470 = vpack.c.b16 %v2364, %v2362
    %v2471 = vpack.c.b16 %v2367, %v2365
    %v2472 = vpack.c.b16 %v2368, %v2366
    %v2473 = vpack.c.b16 %v2371, %v2369
    %v2474 = vpack.c.b16 %v2372, %v2370
    %v2475 = vpack.c.b16 %v2375, %v2373
    %v2476 = vpack.c.b16 %v2376, %v2374
    %v2477 = vpack.c.b16 %v2379, %v2377
    %v2478 = vpack.c.b16 %v2380, %v2378
    %v2479 = vpack.c.b16 %v2383, %v2381
    %v2480 = vpack.c.b16 %v2384, %v2382
    %v2481 = vpack.c.b16 %v2387, %v2385
    %v2482 = vpack.c.b16 %v2388, %v2386
    %v2483 = vpack.c.b16 %v2391, %v2389
    %v2484 = vpack.c.b16 %v2392, %v2390
    %v2485 = vpack.c.b16 %v2395, %v2393
    %v2486 = vpack.c.b16 %v2396, %v2394
    %v2487 = vpack.c.b16 %v2399, %v2397
    %v2488 = vpack.c.b16 %v2400, %v2398
    %v2489 = vpack.c.b16 %v2403, %v2401
    %v2490 = vpack.c.b16 %v2404, %v2402
    %v2491 = vpack.c.b16 %v2407, %v2405
    %v2492 = vpack.c.b16 %v2408, %v2406
    %v2493 = vpack.c.b16 %v2411, %v2409
    %v2494 = vpack.c.b16 %v2412, %v2410
    %v2495 = vpack.c.b16 %v2415, %v2413
    %v2496 = vpack.c.b16 %v2416, %v2414
    %v2497 = vpack.c.b16 %v2419, %v2417
    %v2498 = vpack.c.b16 %v2420, %v2418
    %v2499 = vpack.c.b16 %v2423, %v2421
    %v2500 = vpack.c.b16 %v2424, %v2422
    %v2501 = vpack.c.b16 %v2427, %v2425
    %v2502 = vpack.c.b16 %v2428, %v2426
    %v2503 = vpack.c.b16 %v2431, %v2429
    %v2504 = vpack.c.b16 %v2432, %v2430
    %v2505 = vpack.c.b16 %v2435, %v2433
    %v2506 = vpack.c.b16 %v2436, %v2434
    %v2507 = vpack.c.b16 %v2439, %v2437
    %v2508 = vpack.c.b16 %v2440, %v2438
    %v2509 = vpack.c.b16 %v2443, %v2441
    %v2510 = vpack.c.b16 %v2444, %v2442
    %v2511 = vpack.c.b16 %v2447, %v2445
    %v2512 = vpack.c.b16 %v2448, %v2446
    %2577 = vmatpush.bf16.msra.mxu0 %v2463
    %2578 = vmatpush.bf16.msra.mxu0 %v2461
    %2579 = vmatpush.bf16.msra.mxu0 %v2459
    %2580 = vmatpush.bf16.msra.mxu0 %v2457
    %2581 = vmatpush.bf16.msra.mxu0 %v2455
    %2582 = vmatpush.bf16.msra.mxu0 %v2453
    %2583 = vmatpush.bf16.msra.mxu0 %v2451
    %2584 = vmatpush.bf16.msra.mxu0 %v2449
    %2585 = vmatmul.bf16.gmra.mxu0 %v2183
    %v2586 = vpop.f32.mrf.mxu0
    %v2587 = vadd.f32 %v2253, %v2586
    %v2588 = vpop.f32.mrf.mxu0
    %v2589 = vadd.f32 %v2253, %v2588
    %2590 = vdwg.mxu0
    %2591 = vmatpush.bf16.msra.mxu0 %v2479
    %2592 = vmatpush.bf16.msra.mxu0 %v2477
    %2593 = vmatpush.bf16.msra.mxu0 %v2475
    %2594 = vmatpush.bf16.msra.mxu0 %v2473
    %2595 = vmatpush.bf16.msra.mxu0 %v2471
    %2596 = vmatpush.bf16.msra.mxu0 %v2469
    %2597 = vmatpush.bf16.msra.mxu0 %v2467
    %2598 = vmatpush.bf16.msra.mxu0 %v2465
    %2599 = vmatmul.bf16.gmra.mxu0 %v2184
    %v2600 = vpop.f32.mrf.mxu0
    %v2601 = vadd.f32 %v2587, %v2600
    %v2602 = vpop.f32.mrf.mxu0
    %v2603 = vadd.f32 %v2589, %v2602
    %2604 = vdwg.mxu0
    %2605 = vmatpush.bf16.msra.mxu0 %v2495
    %2606 = vmatpush.bf16.msra.mxu0 %v2493
    %2607 = vmatpush.bf16.msra.mxu0 %v2491
    %2608 = vmatpush.bf16.msra.mxu0 %v2489
    %2609 = vmatpush.bf16.msra.mxu0 %v2487
    %2610 = vmatpush.bf16.msra.mxu0 %v2485
    %2611 = vmatpush.bf16.msra.mxu0 %v2483
    %2612 = vmatpush.bf16.msra.mxu0 %v2481
    %2613 = vmatmul.bf16.gmra.mxu0 %v2185
    %v2614 = vpop.f32.mrf.mxu0
    %v2615 = vadd.f32 %v2601, %v2614
    %v2616 = vpop.f32.mrf.mxu0
    %v2617 = vadd.f32 %v2603, %v2616
    %2618 = vdwg.mxu0
    %2619 = vmatpush.bf16.msra.mxu0 %v2511
    %2620 = vmatpush.bf16.msra.mxu0 %v2509
    %2621 = vmatpush.bf16.msra.mxu0 %v2507
    %2622 = vmatpush.bf16.msra.mxu0 %v2505
    %2623 = vmatpush.bf16.msra.mxu0 %v2503
    %2624 = vmatpush.bf16.msra.mxu0 %v2501
    %2625 = vmatpush.bf16.msra.mxu0 %v2499
    %2626 = vmatpush.bf16.msra.mxu0 %v2497
    %2627 = vmatmul.bf16.gmra.mxu0 %v2186
    %v2628 = vpop.f32.mrf.mxu0
    %v2629 = vadd.f32 %v2615, %v2628
    %v2630 = vpop.f32.mrf.mxu0
    %v2631 = vadd.f32 %v2617, %v2630
    %2632 = vdwg.mxu0
    %2633 = vmatpush.bf16.msra.mxu0 %v2464
    %2634 = vmatpush.bf16.msra.mxu0 %v2462
    %2635 = vmatpush.bf16.msra.mxu0 %v2460
    %2636 = vmatpush.bf16.msra.mxu0 %v2458
    %2637 = vmatpush.bf16.msra.mxu0 %v2456
    %2638 = vmatpush.bf16.msra.mxu0 %v2454
    %2639 = vmatpush.bf16.msra.mxu0 %v2452
    %2640 = vmatpush.bf16.msra.mxu0 %v2450
    %2641 = vmatmul.bf16.gmra.mxu0 %v2183
    %v2642 = vpop.f32.mrf.mxu0
    %v2643 = vadd.f32 %v2254, %v2642
    %v2644 = vpop.f32.mrf.mxu0
    %v2645 = vadd.f32 %v2254, %v2644
    %2646 = vdwg.mxu0
    %2647 = vmatpush.bf16.msra.mxu0 %v2480
    %2648 = vmatpush.bf16.msra.mxu0 %v2478
    %2649 = vmatpush.bf16.msra.mxu0 %v2476
    %2650 = vmatpush.bf16.msra.mxu0 %v2474
    %2651 = vmatpush.bf16.msra.mxu0 %v2472
    %2652 = vmatpush.bf16.msra.mxu0 %v2470
    %2653 = vmatpush.bf16.msra.mxu0 %v2468
    %2654 = vmatpush.bf16.msra.mxu0 %v2466
    %2655 = vmatmul.bf16.gmra.mxu0 %v2184
    %v2656 = vpop.f32.mrf.mxu0
    %v2657 = vadd.f32 %v2643, %v2656
    %v2658 = vpop.f32.mrf.mxu0
    %v2659 = vadd.f32 %v2645, %v2658
    %2660 = vdwg.mxu0
    %2661 = vmatpush.bf16.msra.mxu0 %v2496
    %2662 = vmatpush.bf16.msra.mxu0 %v2494
    %2663 = vmatpush.bf16.msra.mxu0 %v2492
    %2664 = vmatpush.bf16.msra.mxu0 %v2490
    %2665 = vmatpush.bf16.msra.mxu0 %v2488
    %2666 = vmatpush.bf16.msra.mxu0 %v2486
    %2667 = vmatpush.bf16.msra.mxu0 %v2484
    %2668 = vmatpush.bf16.msra.mxu0 %v2482
    %2669 = vmatmul.bf16.gmra.mxu0 %v2185
    %v2670 = vpop.f32.mrf.mxu0
    %v2671 = vadd.f32 %v2657, %v2670
    %v2672 = vpop.f32.mrf.mxu0
    %v2673 = vadd.f32 %v2659, %v2672
    %2674 = vdwg.mxu0
    %2675 = vmatpush.bf16.msra.mxu0 %v2512
    %2676 = vmatpush.bf16.msra.mxu0 %v2510
    %2677 = vmatpush.bf16.msra.mxu0 %v2508
    %2678 = vmatpush.bf16.msra.mxu0 %v2506
    %2679 = vmatpush.bf16.msra.mxu0 %v2504
    %2680 = vmatpush.bf16.msra.mxu0 %v2502
    %2681 = vmatpush.bf16.msra.mxu0 %v2500
    %2682 = vmatpush.bf16.msra.mxu0 %v2498
    %2683 = vmatmul.bf16.gmra.mxu0 %v2186
    %v2684 = vpop.f32.mrf.mxu0
    %v2685 = vadd.f32 %v2671, %v2684
    %v2686 = vpop.f32.mrf.mxu0
    %v2687 = vadd.f32 %v2673, %v2686
    %2688 = vdwg.mxu0
    %v2689 = vsub.f32 0.0, %v2629
    %v2690 = vsub.f32 0.0, %v2685
    %v2691 = vsub.f32 0.0, %v2631
    %v2692 = vsub.f32 0.0, %v2687
    %v2693 = vmul.f32 %v2689, 1.442695
    %v2694 = vpow.pop %v2693
    %v2695 = vmul.f32 %v2690, 1.442695
    %v2696 = vpow.pop %v2695
    %v2697 = vmul.f32 %v2691, 1.442695
    %v2698 = vpow.pop %v2697
    %v2699 = vmul.f32 %v2692, 1.442695
    %v2700 = vpow.pop %v2699
    %v2701 = vadd.f32 %v2694, 1.0
    %v2702 = vadd.f32 %v2696, 1.0
    %v2703 = vadd.f32 %v2698, 1.0
    %v2704 = vadd.f32 %v2700, 1.0
    %v2705 = vrcp.pop %v2701
    %v2706 = vrcp.pop %v2702
    %v2707 = vrcp.pop %v2703
    %v2708 = vrcp.pop %v2704
    %v2709 = vpack.c.bf16 %v2707, %v2705
    %v2710 = vpack.c.bf16 %v2708, %v2706
    %v2711 = vld [vmem:[#allocation10] sm:$0xf]
    %v2712 = vld [vmem:[#allocation10 + $0x4] sm:$0xf]
    %v2713 = vld [vmem:[#allocation10 + $0x8] sm:$0xf]
    %v2714 = vld [vmem:[#allocation10 + $0xc] sm:$0xf]
    %v2715 = vld [vmem:[#allocation10 + $0x10] sm:$0xf]
    %v2716 = vld [vmem:[#allocation10 + $0x14] sm:$0xf]
    %v2717 = vld [vmem:[#allocation10 + $0x18] sm:$0xf]
    %v2718 = vld [vmem:[#allocation10 + $0x1c] sm:$0xf]
    %v2719 = vld [vmem:[#allocation10 + $0x20] sm:$0xf]
    %v2720 = vld [vmem:[#allocation10 + $0x24] sm:$0xf]
    %v2721 = vld [vmem:[#allocation10 + $0x28] sm:$0xf]
    %v2722 = vld [vmem:[#allocation10 + $0x2c] sm:$0xf]
    %v2723 = vld [vmem:[#allocation10 + $0x30] sm:$0xf]
    %v2724 = vld [vmem:[#allocation10 + $0x34] sm:$0xf]
    %v2725 = vld [vmem:[#allocation10 + $0x38] sm:$0xf]
    %v2726 = vld [vmem:[#allocation10 + $0x3c] sm:$0xf]
    %v2727 = vld [vmem:[#allocation10 + $0x40] sm:$0xf]
    %v2728 = vld [vmem:[#allocation10 + $0x44] sm:$0xf]
    %v2729 = vld [vmem:[#allocation10 + $0x48] sm:$0xf]
    %v2730 = vld [vmem:[#allocation10 + $0x4c] sm:$0xf]
    %v2731 = vld [vmem:[#allocation10 + $0x50] sm:$0xf]
    %v2732 = vld [vmem:[#allocation10 + $0x54] sm:$0xf]
    %v2733 = vld [vmem:[#allocation10 + $0x58] sm:$0xf]
    %v2734 = vld [vmem:[#allocation10 + $0x5c] sm:$0xf]
    %v2735 = vld [vmem:[#allocation10 + $0x60] sm:$0xf]
    %v2736 = vld [vmem:[#allocation10 + $0x64] sm:$0xf]
    %v2737 = vld [vmem:[#allocation10 + $0x68] sm:$0xf]
    %v2738 = vld [vmem:[#allocation10 + $0x6c] sm:$0xf]
    %v2739 = vld [vmem:[#allocation10 + $0x70] sm:$0xf]
    %v2740 = vld [vmem:[#allocation10 + $0x74] sm:$0xf]
    %v2741 = vld [vmem:[#allocation10 + $0x78] sm:$0xf]
    %v2742 = vld [vmem:[#allocation10 + $0x7c] sm:$0xf]
    %v2743 = vld [vmem:[%s6] sm:$0x1]
    %v2745 = vperm.slane %v2743, 0
    %v2779 = vunpack.c.l.b16 %v2711
    %v2780 = vunpack.c.l.b16 %v2712
    %v2781 = vunpack.c.l.b16 %v2713
    %v2782 = vunpack.c.l.b16 %v2714
    %v2783 = vunpack.c.l.b16 %v2715
    %v2784 = vunpack.c.l.b16 %v2716
    %v2785 = vunpack.c.l.b16 %v2717
    %v2786 = vunpack.c.l.b16 %v2718
    %v2787 = vunpack.c.l.b16 %v2719
    %v2788 = vunpack.c.l.b16 %v2720
    %v2789 = vunpack.c.l.b16 %v2721
    %v2790 = vunpack.c.l.b16 %v2722
    %v2791 = vunpack.c.l.b16 %v2723
    %v2792 = vunpack.c.l.b16 %v2724
    %v2793 = vunpack.c.l.b16 %v2725
    %v2794 = vunpack.c.l.b16 %v2726
    %v2795 = vunpack.c.l.b16 %v2727
    %v2796 = vunpack.c.l.b16 %v2728
    %v2797 = vunpack.c.l.b16 %v2729
    %v2798 = vunpack.c.l.b16 %v2730
    %v2799 = vunpack.c.l.b16 %v2731
    %v2800 = vunpack.c.l.b16 %v2732
    %v2801 = vunpack.c.l.b16 %v2733
    %v2802 = vunpack.c.l.b16 %v2734
    %v2803 = vunpack.c.l.b16 %v2735
    %v2804 = vunpack.c.l.b16 %v2736
    %v2805 = vunpack.c.l.b16 %v2737
    %v2806 = vunpack.c.l.b16 %v2738
    %v2807 = vunpack.c.l.b16 %v2739
    %v2808 = vunpack.c.l.b16 %v2740
    %v2809 = vunpack.c.l.b16 %v2741
    %v2810 = vunpack.c.l.b16 %v2742
    %v2811 = vpack.c.b16 %v2780, %v2779
    %v2812 = vpack.c.b16 %v2782, %v2781
    %v2813 = vpack.c.b16 %v2784, %v2783
    %v2814 = vpack.c.b16 %v2786, %v2785
    %v2815 = vpack.c.b16 %v2788, %v2787
    %v2816 = vpack.c.b16 %v2790, %v2789
    %v2817 = vpack.c.b16 %v2792, %v2791
    %v2818 = vpack.c.b16 %v2794, %v2793
    %v2819 = vpack.c.b16 %v2796, %v2795
    %v2820 = vpack.c.b16 %v2798, %v2797
    %v2821 = vpack.c.b16 %v2800, %v2799
    %v2822 = vpack.c.b16 %v2802, %v2801
    %v2823 = vpack.c.b16 %v2804, %v2803
    %v2824 = vpack.c.b16 %v2806, %v2805
    %v2825 = vpack.c.b16 %v2808, %v2807
    %v2826 = vpack.c.b16 %v2810, %v2809
    %2843 = vmatpush.bf16.msra.mxu0 %v2818
    %2844 = vmatpush.bf16.msra.mxu0 %v2817
    %2845 = vmatpush.bf16.msra.mxu0 %v2816
    %2846 = vmatpush.bf16.msra.mxu0 %v2815
    %2847 = vmatpush.bf16.msra.mxu0 %v2814
    %2848 = vmatpush.bf16.msra.mxu0 %v2813
    %2849 = vmatpush.bf16.msra.mxu0 %v2812
    %2850 = vmatpush.bf16.msra.mxu0 %v2811
    %2851 = vmatmul.bf16.gmra.mxu0 %v2709
    %v2852 = vpop.f32.mrf.mxu0
    %v2853 = vadd.f32 %v2745, %v2852
    %v2854 = vpop.f32.mrf.mxu0
    %v2855 = vadd.f32 %v2745, %v2854
    %2856 = vdwg.mxu0
    %2857 = vmatpush.bf16.msra.mxu0 %v2826
    %2858 = vmatpush.bf16.msra.mxu0 %v2825
    %2859 = vmatpush.bf16.msra.mxu0 %v2824
    %2860 = vmatpush.bf16.msra.mxu0 %v2823
    %2861 = vmatpush.bf16.msra.mxu0 %v2822
    %2862 = vmatpush.bf16.msra.mxu0 %v2821
    %2863 = vmatpush.bf16.msra.mxu0 %v2820
    %2864 = vmatpush.bf16.msra.mxu0 %v2819
    %2865 = vmatmul.bf16.gmra.mxu0 %v2710
    %v2866 = vpop.f32.mrf.mxu0
    %v2867 = vadd.f32 %v2853, %v2866
    %v2868 = vpop.f32.mrf.mxu0
    %v2869 = vadd.f32 %v2855, %v2868
    %2870 = vdwg.mxu0
    %v2871 = vsub.f32 0.0, %v2867
    %v2872 = vsub.f32 0.0, %v2869
    %v2873 = vmul.f32 %v2871, 1.442695
    %v2874 = vpow.pop %v2873
    %v2875 = vmul.f32 %v2872, 1.442695
    %v2876 = vpow.pop %v2875
    %v2877 = vadd.f32 %v2874, 1.0
    %v2878 = vadd.f32 %v2876, 1.0
    %v2879 = vrcp.pop %v2877
    %v2880 = vrcp.pop %v2878
    %v2881 = vpack.c.bf16 %v2880, %v2879
    %v2882 = vld [vmem:[#allocation11] sm:$0xf]
    %v2883 = vld [vmem:[#allocation11 + $0x4] sm:$0xf]
    %v2884 = vld [vmem:[#allocation11 + $0x8] sm:$0xf]
    %v2885 = vld [vmem:[#allocation11 + $0xc] sm:$0xf]
    %v2886 = vld [vmem:[#allocation11 + $0x10] sm:$0xf]
    %v2887 = vld [vmem:[#allocation11 + $0x14] sm:$0xf]
    %v2888 = vld [vmem:[#allocation11 + $0x18] sm:$0xf]
    %v2889 = vld [vmem:[#allocation11 + $0x1c] sm:$0xf]
    %v2890 = vld [vmem:[#allocation11 + $0x20] sm:$0xf]
    %v2891 = vld [vmem:[#allocation11 + $0x24] sm:$0xf]
    %v2892 = vld [vmem:[#allocation11 + $0x28] sm:$0xf]
    %v2893 = vld [vmem:[#allocation11 + $0x2c] sm:$0xf]
    %v2894 = vld [vmem:[#allocation11 + $0x30] sm:$0xf]
    %v2895 = vld [vmem:[#allocation11 + $0x34] sm:$0xf]
    %v2896 = vld [vmem:[#allocation11 + $0x38] sm:$0xf]
    %v2897 = vld [vmem:[#allocation11 + $0x3c] sm:$0xf]
    %v2898 = vld [vmem:[%s8] sm:$0x1]
    %v2900 = vperm.slane %v2898, 0
    %v2918 = vunpack.c.l.b16 %v2882
    %v2919 = vunpack.c.l.b16 %v2883
    %v2920 = vunpack.c.l.b16 %v2884
    %v2921 = vunpack.c.l.b16 %v2885
    %v2922 = vunpack.c.l.b16 %v2886
    %v2923 = vunpack.c.l.b16 %v2887
    %v2924 = vunpack.c.l.b16 %v2888
    %v2925 = vunpack.c.l.b16 %v2889
    %v2926 = vunpack.c.l.b16 %v2890
    %v2927 = vunpack.c.l.b16 %v2891
    %v2928 = vunpack.c.l.b16 %v2892
    %v2929 = vunpack.c.l.b16 %v2893
    %v2930 = vunpack.c.l.b16 %v2894
    %v2931 = vunpack.c.l.b16 %v2895
    %v2932 = vunpack.c.l.b16 %v2896
    %v2933 = vunpack.c.l.b16 %v2897
    %v2934 = vpack.c.b16 %v2919, %v2918
    %v2935 = vpack.c.b16 %v2921, %v2920
    %v2936 = vpack.c.b16 %v2923, %v2922
    %v2937 = vpack.c.b16 %v2925, %v2924
    %v2938 = vpack.c.b16 %v2927, %v2926
    %v2939 = vpack.c.b16 %v2929, %v2928
    %v2940 = vpack.c.b16 %v2931, %v2930
    %v2941 = vpack.c.b16 %v2933, %v2932
    %2950 = vmatpush.bf16.msra.mxu0 %v2941
    %2951 = vmatpush.bf16.msra.mxu0 %v2940
    %2952 = vmatpush.bf16.msra.mxu0 %v2939
    %2953 = vmatpush.bf16.msra.mxu0 %v2938
    %2954 = vmatpush.bf16.msra.mxu0 %v2937
    %2955 = vmatpush.bf16.msra.mxu0 %v2936
    %2956 = vmatpush.bf16.msra.mxu0 %v2935
    %2957 = vmatpush.bf16.msra.mxu0 %v2934
    %2958 = vmatmul.bf16.gmra.mxu0 %v2881
    %v2959 = vpop.f32.mrf.mxu0
    %v2960 = vadd.f32 %v2900, %v2959
    %v2961 = vpop.f32.mrf.mxu0
    %v2962 = vadd.f32 %v2900, %v2961
    %2963 = vdwg.mxu0
    %v2964 = vsub.f32 0.0, %v2960
    %v2965 = vsub.f32 0.0, %v2962
    %v2966 = vmul.f32 %v2964, 1.442695
    %v2967 = vpow.pop %v2966
    %v2968 = vmul.f32 %v2965, 1.442695
    %v2969 = vpow.pop %v2968
    %v2970 = vadd.f32 %v2967, 1.0
    %v2971 = vadd.f32 %v2969, 1.0
    %v2972 = vrcp.pop %v2970
    %v2973 = vrcp.pop %v2971
    %2974 = vst [vmem:[#allocation13] sm:$0xff] %v2972
    %2975 = vst [vmem:[#allocation13 + $0x8] sm:$0xff] %v2973
    // Predicated region
    $region62: #{tpu_custom_call.1} parent=1 // pred_check
      _
    $region63: #{tpu_custom_call.1} parent=1 // pred_check_branch
      %2977 = sbr.rel (0) target = $region65
    $region64: #{tpu_custom_call.1} parent=1 // pred_region
      %2979 = vsyncadd [#allocation4], 0
      %s2980 = sshll.u32 [#allocation13], 4
      %s2981 = int_to_ptr.vmem [resolvable:$true] %s2980
      %s2982 = sshll.u32 %s9, 4
      %s2983 = int_to_ptr.hbm [resolvable:$true] %s2982
      %2988 = dma.vmem_to_hbm [thread:$0]  %s2981, 256, %s2983, [#allocation4], 128, 128, 8
    $region65: #{tpu_custom_call.1} parent=1 // pred_fallthru
      _
    // Predicated region
    $region66: #{tpu_custom_call.1} parent=1 // pred_check
      _
    $region67: #{tpu_custom_call.1} parent=1 // pred_check_branch
      %2990 = sbr.rel (0) target = $region69
    $region68: #{tpu_custom_call.1} parent=1 // pred_region
      %2992 = dma.done [#allocation4], 256
    $region69: #{tpu_custom_call.1} parent=1 // pred_fallthru
      _
    %2993 = vsyncpa [#allocation3], 1
    %2994 = vsyncpa [#allocation6], 1
    %2995 = vsyncpa [#allocation9], 1
    %2996 = vsyncpa [#allocation12], 1
    %2997 = vsyncpa [#allocation4], 1

</llo_original>
